<compile_context>
chip_gen: v6e
topology: v6e:2x2x1
jax: 0.10.0
libtpu: 0.0.40
codegen_flags: <defaults>
</compile_context>

<pallas_src>
import functools

import jax
import jax.numpy as jnp
from jax.experimental import pallas as pl
from jax.experimental.pallas import tpu as pltpu


# ---------------------------------------------------------------------------
# Fused Pallas kernel: one grid step == B images, full network in VMEM
# ---------------------------------------------------------------------------
def _fcn_fused_kernel(x_ref, w1_ref, b1_ref, w2_ref, b2_ref, w3_ref, b3_ref,
                      o_ref, *, H, W, B, compute_dtype):
    """Fused ConvT(5x5,s1,p0)+ReLU -> Conv(3x3)+ReLU -> Conv(3x3) for B images.

    Activations are kept as (channels, flattened-spatial) with the row-major flat
    index (pitch P = W + 8) on the LANE axis.  Each convolution is ONE matmul:
    the kh*kw taps are folded into the contraction dim by stacking the lane-shifted
    slices along sublanes, K index = (a*kw + b)*cin + c (weights are pre-packed in
    the same order).  Columns beyond each layer's valid width hold garbage but are
    never read by a valid output position.
    """
    P = W + 8                    # row pitch of every flattened feature map
    rows1 = (H + 4) * P + 4      # layer-1 positions computed (+slop for layer-2 taps)
    rows2 = (H + 2) * P + 2      # layer-2 positions computed (+slop for layer-3 taps)
    rows3 = H * P                # layer-3 positions computed

    # Hoist small weight/bias loads out of the per-image loop.
    w1 = w1_ref[...]; b1 = b1_ref[...]
    w2 = w2_ref[...]; b2 = b2_ref[...]
    w3 = w3_ref[...]; b3 = b3_ref[...]

    def conv(x_ct, w_pk, b_v, kh, kw, rows_out, relu, out_dtype):
        cin = x_ct.shape[0]
        # Tap-stacked activation: (cin*kh*kw, rows_out), K index = (a*kw+b)*cin + c.
        chunks = []
        for a in range(kh):
            for bb in range(kw):
                s = a * P + bb
                chunks.append(jax.lax.slice(x_ct, (0, s), (cin, s + rows_out)))
        x_stack = jnp.concatenate(chunks, axis=0)
        y = jnp.dot(w_pk, x_stack, preferred_element_type=jnp.float32) + b_v
        if relu:
            y = jnp.maximum(y, 0.0)
        return y.astype(out_dtype)

    for j in range(B):
        x0 = x_ref[j]                                               # (Cin, R0) bf16
        y1 = conv(x0, w1, b1, 5, 5, rows1, True, compute_dtype)     # (4, rows1) bf16
        y2 = conv(y1, w2, b2, 3, 3, rows2, True, jnp.float32)       # (8, rows2) f32
        y3 = conv(y2, w3, b3, 3, 3, rows3, False, jnp.float32)      # (1, rows3) f32
        o_ref[pl.ds(j, 1), :] = y3


# ---------------------------------------------------------------------------
# Host-side prep (tiny tensors only) + batching policy
# ---------------------------------------------------------------------------
def _prep_params(params, cin, compute_dtype):
    # ConvTranspose2d(k=5, s=1, p=0) == 'full' conv with the kernel spatially flipped
    # and in/out channels swapped.  All weights pre-packed as (cout, kh*kw*cin) with
    # K ordered (a, b, c) to match the kernel's tap stack.
    w_eq = jnp.transpose(jnp.flip(params["t1_w"], (2, 3)), (1, 0, 2, 3))  # (4,Cin,5,5)
    w1s = jnp.transpose(w_eq, (0, 2, 3, 1)).reshape(4, 25 * cin)
    w2s = jnp.transpose(params["c1_w"], (0, 2, 3, 1)).reshape(8, 36)
    w3s = jnp.transpose(params["c2_w"], (0, 2, 3, 1)).reshape(1, 72)
    return (w1s.astype(compute_dtype),
            params["t1_b"].reshape(4, 1).astype(jnp.float32),
            w2s.astype(compute_dtype),
            params["c1_b"].reshape(8, 1).astype(jnp.float32),
            w3s.astype(jnp.float32),          # final (cheap) layer stays f32
            params["c2_b"].reshape(1, 1).astype(jnp.float32))


def _choose_batch_block(n, cin, h, w):
    """Images per grid step: amortize step overhead, keep >=~8 steps, bound VMEM."""
    P = w + 8
    # Rough per-image resident bytes: input + tap-stacked activations + outputs.
    per_img = (cin * 2 + 25 * cin * 2 + 4 * 2 + 36 * 2 + 8 * 4 + 72 * 4 + 4) \
        * (h + 9) * P
    b_vmem = max(1, (8 << 20) // max(per_img, 1))   # budget vs. v7x's 64 MiB VMEM
    b_steps = max(1, n // 8)                        # >= ~8 grid steps (4 per v7x TC)
    return int(max(1, min(n, 16, b_vmem, b_steps)))


def fcn_forward(x_nchw, params, *, compute_dtype=jnp.bfloat16):
    """Forward pass of the PyTorch FCN module.  x: (N, Cin, H, W) -> (N, 1, H, W)."""
    n, cin, h, w = x_nchw.shape
    P = w + 8
    R0 = (h + 9) * P
    rows3 = h * P
    B = _choose_batch_block(n, cin, h, w)
    G = -(-n // B)
    n_pad = G * B

    # One small pad: batch padded to a multiple of B; spatial padded 4 all around
    # ('full'-conv padding for the transposed conv) + 1 extra bottom row of slop so
    # every static tap slice in the kernel stays in bounds.  NCHW already puts
    # channels on sublanes / flat spatial on lanes, so the reshape is free.
    xp = jnp.pad(x_nchw.astype(compute_dtype),
                 ((0, n_pad - n), (0, 0), (4, 5), (4, 4)))
    x2 = xp.reshape(G, B, cin, R0)

    w1s, b1, w2s, b2, w3s, b3 = _prep_params(params, cin, compute_dtype)

    out = pl.pallas_call(
        functools.partial(_fcn_fused_kernel, H=h, W=w, B=B,
                          compute_dtype=compute_dtype),
        out_shape=jax.ShapeDtypeStruct((G, B, rows3), jnp.float32),
        grid=(G,),
        in_specs=[
            pl.BlockSpec((None, B, cin, R0), lambda i: (i, 0, 0, 0)),  # B images/step
            pl.BlockSpec((4, 25 * cin), lambda i: (0, 0)),   # layer-1 packed weights
            pl.BlockSpec((4, 1), lambda i: (0, 0)),          # layer-1 bias
            pl.BlockSpec((8, 36), lambda i: (0, 0)),         # layer-2 packed weights
            pl.BlockSpec((8, 1), lambda i: (0, 0)),          # layer-2 bias
            pl.BlockSpec((1, 72), lambda i: (0, 0)),         # layer-3 packed weights
            pl.BlockSpec((1, 1), lambda i: (0, 0)),          # layer-3 bias
        ],
        out_specs=pl.BlockSpec((None, B, rows3), lambda i: (i, 0, 0)),
        compiler_params=pltpu.CompilerParams(
            dimension_semantics=("parallel",)),
    )(x2, w1s, b1, w2s, b2, w3s, b3)

    # Rows have pitch P; crop the W valid columns and drop batch padding.
    out = out.reshape(n_pad, h, P)[:n, :, :w]
    return out[:, None, :, :]


# ---------------------------------------------------------------------------
# Pure-JAX reference (XLA convs) for correctness checking
# ---------------------------------------------------------------------------
def fcn_reference(x, params):
    dn = ("NCHW", "OIHW", "NCHW")
    hp = jax.lax.Precision.HIGHEST
    w_eq = jnp.transpose(jnp.flip(params["t1_w"], (2, 3)), (1, 0, 2, 3))  # (4,Cin,5,5)
    y = jax.lax.conv_general_dilated(x, w_eq, (1, 1), ((4, 4), (4, 4)),
                                     dimension_numbers=dn, precision=hp)
    y = jax.nn.relu(y + params["t1_b"].reshape(1, -1, 1, 1))
    y = jax.lax.conv_general_dilated(y, params["c1_w"], (1, 1), "VALID",
                                     dimension_numbers=dn, precision=hp)
    y = jax.nn.relu(y + params["c1_b"].reshape(1, -1, 1, 1))
    y = jax.lax.conv_general_dilated(y, params["c2_w"], (1, 1), "VALID",
                                     dimension_numbers=dn, precision=hp)
    return y + params["c2_b"].reshape(1, -1, 1, 1)


if __name__ == "__main__":
    key = jax.random.PRNGKey(0)
    ks = jax.random.split(key, 7)
    N, CIN, H, W = 2, 4, 16, 16
    x = jax.random.normal(ks[0], (N, CIN, H, W), jnp.float32)
    params = {
        # PyTorch layouts: ConvTranspose2d weight (Cin, Cout, kH, kW); Conv2d (Cout, Cin, kH, kW)
        "t1_w": 0.1 * jax.random.normal(ks[1], (CIN, 4, 5, 5), jnp.float32),
        "t1_b": 0.1 * jax.random.normal(ks[2], (4,), jnp.float32),
        "c1_w": 0.1 * jax.random.normal(ks[3], (8, 4, 3, 3), jnp.float32),
        "c1_b": 0.1 * jax.random.normal(ks[4], (8,), jnp.float32),
        "c2_w": 0.1 * jax.random.normal(ks[5], (1, 8, 3, 3), jnp.float32),
        "c2_b": 0.1 * jax.random.normal(ks[6], (1,), jnp.float32),
    }

    out = jax.block_until_ready(jax.jit(fcn_forward)(x, params))
    assert out.shape == (N, 1, H, W), out.shape
    assert bool(jnp.all(jnp.isfinite(out)))

    ref = fcn_reference(x, params)
    err = float(jnp.max(jnp.abs(out - ref)))
    assert err < 5e-2, f"max abs err vs reference = {err}"
    print("KERNEL_OK")
</pallas_src>

<mosaic_0001>
module attributes {stable_mosaic.version = 11 : i64} {
  func.func @_fcn_fused_kernel(%arg0: i32, %arg1: memref<1x1x4x600xbf16, #tpu.memory_space<vmem>>, %arg2: memref<4x100xbf16, #tpu.memory_space<vmem>>, %arg3: memref<4x1xf32, #tpu.memory_space<vmem>>, %arg4: memref<8x36xbf16, #tpu.memory_space<vmem>>, %arg5: memref<8x1xf32, #tpu.memory_space<vmem>>, %arg6: memref<1x72xf32, #tpu.memory_space<vmem>>, %arg7: memref<1x1xf32, #tpu.memory_space<vmem>>, %arg8: memref<1x1x384xf32, #tpu.memory_space<vmem>>) attributes {dimension_semantics = [#tpu.dimension_semantics<parallel>], iteration_bounds = array<i64: 2>, scalar_prefetch = 0 : i64, scratch_operands = 0 : i64, tpu.core_type = #tpu.core_type<tc>, window_params = [{transform_indices = @transform_0, window_bounds = array<i64: 1, 1, 4, 600>}, {pipeline_mode = #tpu.pipeline_mode<synchronous>, transform_indices = @transform_1, window_bounds = array<i64: 4, 100>}, {pipeline_mode = #tpu.pipeline_mode<synchronous>, transform_indices = @transform_2, window_bounds = array<i64: 4, 1>}, {pipeline_mode = #tpu.pipeline_mode<synchronous>, transform_indices = @transform_3, window_bounds = array<i64: 8, 36>}, {pipeline_mode = #tpu.pipeline_mode<synchronous>, transform_indices = @transform_4, window_bounds = array<i64: 8, 1>}, {pipeline_mode = #tpu.pipeline_mode<synchronous>, transform_indices = @transform_5, window_bounds = array<i64: 1, 72>}, {pipeline_mode = #tpu.pipeline_mode<synchronous>, transform_indices = @transform_6, window_bounds = array<i64: 1, 1>}, {transform_indices = @transform_7, window_bounds = array<i64: 1, 1, 384>}]} {
    %c0 = arith.constant 0 : index
    %c0_0 = arith.constant 0 : index
    %0 = vector.load %arg2[%c0, %c0_0] : memref<4x100xbf16, #tpu.memory_space<vmem>>, vector<4x100xbf16>
    %c0_1 = arith.constant 0 : index
    %c0_2 = arith.constant 0 : index
    %1 = vector.load %arg3[%c0_1, %c0_2] : memref<4x1xf32, #tpu.memory_space<vmem>>, vector<4x1xf32>
    %c0_3 = arith.constant 0 : index
    %c0_4 = arith.constant 0 : index
    %2 = vector.load %arg4[%c0_3, %c0_4] : memref<8x36xbf16, #tpu.memory_space<vmem>>, vector<8x36xbf16>
    %c0_5 = arith.constant 0 : index
    %c0_6 = arith.constant 0 : index
    %3 = vector.load %arg5[%c0_5, %c0_6] : memref<8x1xf32, #tpu.memory_space<vmem>>, vector<8x1xf32>
    %c0_7 = arith.constant 0 : index
    %c0_8 = arith.constant 0 : index
    %4 = vector.load %arg6[%c0_7, %c0_8] : memref<1x72xf32, #tpu.memory_space<vmem>>, vector<1x72xf32>
    %c0_9 = arith.constant 0 : index
    %c0_10 = arith.constant 0 : index
    %5 = vector.load %arg7[%c0_9, %c0_10] : memref<1x1xf32, #tpu.memory_space<vmem>>, vector<1x1xf32>
    %c0_11 = arith.constant 0 : index
    %c0_12 = arith.constant 0 : index
    %c0_13 = arith.constant 0 : index
    %c0_14 = arith.constant 0 : index
    %6 = vector.load %arg1[%c0_11, %c0_12, %c0_13, %c0_14] : memref<1x1x4x600xbf16, #tpu.memory_space<vmem>>, vector<1x1x4x600xbf16>
    %7 = vector.shape_cast %6 : vector<1x1x4x600xbf16> to vector<4x600xbf16>
    %8 = vector.extract_strided_slice %7 {offsets = [0, 0], sizes = [4, 484], strides = [1, 1]} : vector<4x600xbf16> to vector<4x484xbf16>
    %9 = vector.extract_strided_slice %7 {offsets = [0, 1], sizes = [4, 484], strides = [1, 1]} : vector<4x600xbf16> to vector<4x484xbf16>
    %10 = vector.extract_strided_slice %7 {offsets = [0, 2], sizes = [4, 484], strides = [1, 1]} : vector<4x600xbf16> to vector<4x484xbf16>
    %11 = vector.extract_strided_slice %7 {offsets = [0, 3], sizes = [4, 484], strides = [1, 1]} : vector<4x600xbf16> to vector<4x484xbf16>
    %12 = vector.extract_strided_slice %7 {offsets = [0, 4], sizes = [4, 484], strides = [1, 1]} : vector<4x600xbf16> to vector<4x484xbf16>
    %13 = vector.extract_strided_slice %7 {offsets = [0, 24], sizes = [4, 484], strides = [1, 1]} : vector<4x600xbf16> to vector<4x484xbf16>
    %14 = vector.extract_strided_slice %7 {offsets = [0, 25], sizes = [4, 484], strides = [1, 1]} : vector<4x600xbf16> to vector<4x484xbf16>
    %15 = vector.extract_strided_slice %7 {offsets = [0, 26], sizes = [4, 484], strides = [1, 1]} : vector<4x600xbf16> to vector<4x484xbf16>
    %16 = vector.extract_strided_slice %7 {offsets = [0, 27], sizes = [4, 484], strides = [1, 1]} : vector<4x600xbf16> to vector<4x484xbf16>
    %17 = vector.extract_strided_slice %7 {offsets = [0, 28], sizes = [4, 484], strides = [1, 1]} : vector<4x600xbf16> to vector<4x484xbf16>
    %18 = vector.extract_strided_slice %7 {offsets = [0, 48], sizes = [4, 484], strides = [1, 1]} : vector<4x600xbf16> to vector<4x484xbf16>
    %19 = vector.extract_strided_slice %7 {offsets = [0, 49], sizes = [4, 484], strides = [1, 1]} : vector<4x600xbf16> to vector<4x484xbf16>
    %20 = vector.extract_strided_slice %7 {offsets = [0, 50], sizes = [4, 484], strides = [1, 1]} : vector<4x600xbf16> to vector<4x484xbf16>
    %21 = vector.extract_strided_slice %7 {offsets = [0, 51], sizes = [4, 484], strides = [1, 1]} : vector<4x600xbf16> to vector<4x484xbf16>
    %22 = vector.extract_strided_slice %7 {offsets = [0, 52], sizes = [4, 484], strides = [1, 1]} : vector<4x600xbf16> to vector<4x484xbf16>
    %23 = vector.extract_strided_slice %7 {offsets = [0, 72], sizes = [4, 484], strides = [1, 1]} : vector<4x600xbf16> to vector<4x484xbf16>
    %24 = vector.extract_strided_slice %7 {offsets = [0, 73], sizes = [4, 484], strides = [1, 1]} : vector<4x600xbf16> to vector<4x484xbf16>
    %25 = vector.extract_strided_slice %7 {offsets = [0, 74], sizes = [4, 484], strides = [1, 1]} : vector<4x600xbf16> to vector<4x484xbf16>
    %26 = vector.extract_strided_slice %7 {offsets = [0, 75], sizes = [4, 484], strides = [1, 1]} : vector<4x600xbf16> to vector<4x484xbf16>
    %27 = vector.extract_strided_slice %7 {offsets = [0, 76], sizes = [4, 484], strides = [1, 1]} : vector<4x600xbf16> to vector<4x484xbf16>
    %28 = vector.extract_strided_slice %7 {offsets = [0, 96], sizes = [4, 484], strides = [1, 1]} : vector<4x600xbf16> to vector<4x484xbf16>
    %29 = vector.extract_strided_slice %7 {offsets = [0, 97], sizes = [4, 484], strides = [1, 1]} : vector<4x600xbf16> to vector<4x484xbf16>
    %30 = vector.extract_strided_slice %7 {offsets = [0, 98], sizes = [4, 484], strides = [1, 1]} : vector<4x600xbf16> to vector<4x484xbf16>
    %31 = vector.extract_strided_slice %7 {offsets = [0, 99], sizes = [4, 484], strides = [1, 1]} : vector<4x600xbf16> to vector<4x484xbf16>
    %32 = vector.extract_strided_slice %7 {offsets = [0, 100], sizes = [4, 484], strides = [1, 1]} : vector<4x600xbf16> to vector<4x484xbf16>
    %33 = tpu.concatenate %8, %9, %10, %11, %12, %13, %14, %15, %16, %17, %18, %19, %20, %21, %22, %23 in 0 : vector<4x484xbf16>, vector<4x484xbf16>, vector<4x484xbf16>, vector<4x484xbf16>, vector<4x484xbf16>, vector<4x484xbf16>, vector<4x484xbf16>, vector<4x484xbf16>, vector<4x484xbf16>, vector<4x484xbf16>, vector<4x484xbf16>, vector<4x484xbf16>, vector<4x484xbf16>, vector<4x484xbf16>, vector<4x484xbf16>, vector<4x484xbf16> -> vector<64x484xbf16>
    %34 = tpu.concatenate %24, %25, %26, %27, %28, %29, %30, %31, %32 in 0 : vector<4x484xbf16>, vector<4x484xbf16>, vector<4x484xbf16>, vector<4x484xbf16>, vector<4x484xbf16>, vector<4x484xbf16>, vector<4x484xbf16>, vector<4x484xbf16>, vector<4x484xbf16> -> vector<36x484xbf16>
    %35 = tpu.concatenate %33, %34 in 0 : vector<64x484xbf16>, vector<36x484xbf16> -> vector<100x484xbf16>
    %cst = arith.constant dense<0.000000e+00> : vector<4x484xf32>
    %36 = tpu.matmul %0, %35, %cst {dimension_numbers = #tpu.dot_dimension_numbers<[1], [0], [0], [1], [0, 0, 1, 1], [], []>} : vector<4x100xbf16>, vector<100x484xbf16>, vector<4x484xf32> -> vector<4x484xf32>
    %37 = vector.broadcast %1 : vector<4x1xf32> to vector<4x484xf32>
    %38 = arith.addf %36, %37 : vector<4x484xf32>
    %cst_15 = arith.constant 0.000000e+00 : f32
    %39 = vector.broadcast %cst_15 : f32 to vector<4x484xf32>
    %40 = arith.maximumf %38, %39 : vector<4x484xf32>
    %41 = arith.truncf %40 : vector<4x484xf32> to vector<4x484xbf16>
    %42 = vector.extract_strided_slice %41 {offsets = [0, 0], sizes = [4, 434], strides = [1, 1]} : vector<4x484xbf16> to vector<4x434xbf16>
    %43 = vector.extract_strided_slice %41 {offsets = [0, 1], sizes = [4, 434], strides = [1, 1]} : vector<4x484xbf16> to vector<4x434xbf16>
    %44 = vector.extract_strided_slice %41 {offsets = [0, 2], sizes = [4, 434], strides = [1, 1]} : vector<4x484xbf16> to vector<4x434xbf16>
    %45 = vector.extract_strided_slice %41 {offsets = [0, 24], sizes = [4, 434], strides = [1, 1]} : vector<4x484xbf16> to vector<4x434xbf16>
    %46 = vector.extract_strided_slice %41 {offsets = [0, 25], sizes = [4, 434], strides = [1, 1]} : vector<4x484xbf16> to vector<4x434xbf16>
    %47 = vector.extract_strided_slice %41 {offsets = [0, 26], sizes = [4, 434], strides = [1, 1]} : vector<4x484xbf16> to vector<4x434xbf16>
    %48 = vector.extract_strided_slice %41 {offsets = [0, 48], sizes = [4, 434], strides = [1, 1]} : vector<4x484xbf16> to vector<4x434xbf16>
    %49 = vector.extract_strided_slice %41 {offsets = [0, 49], sizes = [4, 434], strides = [1, 1]} : vector<4x484xbf16> to vector<4x434xbf16>
    %50 = vector.extract_strided_slice %41 {offsets = [0, 50], sizes = [4, 434], strides = [1, 1]} : vector<4x484xbf16> to vector<4x434xbf16>
    %51 = tpu.concatenate %42, %43, %44, %45, %46, %47, %48, %49, %50 in 0 : vector<4x434xbf16>, vector<4x434xbf16>, vector<4x434xbf16>, vector<4x434xbf16>, vector<4x434xbf16>, vector<4x434xbf16>, vector<4x434xbf16>, vector<4x434xbf16>, vector<4x434xbf16> -> vector<36x434xbf16>
    %cst_16 = arith.constant dense<0.000000e+00> : vector<8x434xf32>
    %52 = tpu.matmul %2, %51, %cst_16 {dimension_numbers = #tpu.dot_dimension_numbers<[1], [0], [0], [1], [0, 0, 1, 1], [], []>} : vector<8x36xbf16>, vector<36x434xbf16>, vector<8x434xf32> -> vector<8x434xf32>
    %53 = vector.broadcast %3 : vector<8x1xf32> to vector<8x434xf32>
    %54 = arith.addf %52, %53 : vector<8x434xf32>
    %cst_17 = arith.constant 0.000000e+00 : f32
    %55 = vector.broadcast %cst_17 : f32 to vector<8x434xf32>
    %56 = arith.maximumf %54, %55 : vector<8x434xf32>
    %57 = vector.extract_strided_slice %56 {offsets = [0, 0], sizes = [8, 384], strides = [1, 1]} : vector<8x434xf32> to vector<8x384xf32>
    %58 = vector.extract_strided_slice %56 {offsets = [0, 1], sizes = [8, 384], strides = [1, 1]} : vector<8x434xf32> to vector<8x384xf32>
    %59 = vector.extract_strided_slice %56 {offsets = [0, 2], sizes = [8, 384], strides = [1, 1]} : vector<8x434xf32> to vector<8x384xf32>
    %60 = vector.extract_strided_slice %56 {offsets = [0, 24], sizes = [8, 384], strides = [1, 1]} : vector<8x434xf32> to vector<8x384xf32>
    %61 = vector.extract_strided_slice %56 {offsets = [0, 25], sizes = [8, 384], strides = [1, 1]} : vector<8x434xf32> to vector<8x384xf32>
    %62 = vector.extract_strided_slice %56 {offsets = [0, 26], sizes = [8, 384], strides = [1, 1]} : vector<8x434xf32> to vector<8x384xf32>
    %63 = vector.extract_strided_slice %56 {offsets = [0, 48], sizes = [8, 384], strides = [1, 1]} : vector<8x434xf32> to vector<8x384xf32>
    %64 = vector.extract_strided_slice %56 {offsets = [0, 49], sizes = [8, 384], strides = [1, 1]} : vector<8x434xf32> to vector<8x384xf32>
    %65 = vector.extract_strided_slice %56 {offsets = [0, 50], sizes = [8, 384], strides = [1, 1]} : vector<8x434xf32> to vector<8x384xf32>
    %66 = tpu.concatenate %57, %58, %59, %60, %61, %62, %63, %64, %65 in 0 : vector<8x384xf32>, vector<8x384xf32>, vector<8x384xf32>, vector<8x384xf32>, vector<8x384xf32>, vector<8x384xf32>, vector<8x384xf32>, vector<8x384xf32>, vector<8x384xf32> -> vector<72x384xf32>
    %cst_18 = arith.constant dense<0.000000e+00> : vector<1x384xf32>
    %67 = tpu.matmul %4, %66, %cst_18 {dimension_numbers = #tpu.dot_dimension_numbers<[1], [0], [0], [1], [0, 0, 1, 1], [], []>} : vector<1x72xf32>, vector<72x384xf32>, vector<1x384xf32> -> vector<1x384xf32>
    %68 = vector.broadcast %5 : vector<1x1xf32> to vector<1x384xf32>
    %69 = arith.addf %67, %68 : vector<1x384xf32>
    %c0_19 = arith.constant 0 : index
    %c0_20 = arith.constant 0 : index
    %c0_21 = arith.constant 0 : index
    %70 = vector.load %arg8[%c0_19, %c0_20, %c0_21] : memref<1x1x384xf32, #tpu.memory_space<vmem>>, vector<1x1x384xf32>
    %71 = vector.shape_cast %70 : vector<1x1x384xf32> to vector<1x384xf32>
    %72 = vector.shape_cast %69 : vector<1x384xf32> to vector<1x1x384xf32>
    tpu.vector_store %arg8[%c0_19, %c0_20, %c0_21], %72 {strides = array<i32>} : memref<1x1x384xf32, #tpu.memory_space<vmem>>, vector<1x1x384xf32>,
    return
  }
  func.func @transform_0(%arg0: i32) -> (i32, i32, i32, i32) {
    %c0_i32 = arith.constant 0 : i32
    %c0_i32_0 = arith.constant 0 : i32
    %c0_i32_1 = arith.constant 0 : i32
    %c0_i32_2 = arith.constant 0 : i32
    return %arg0, %c0_i32, %c0_i32_0, %c0_i32_1 : i32, i32, i32, i32
  }
  func.func @transform_1(%arg0: i32) -> (i32, i32) {
    %c0_i32 = arith.constant 0 : i32
    %c0_i32_0 = arith.constant 0 : i32
    %c0_i32_1 = arith.constant 0 : i32
    return %c0_i32, %c0_i32_0 : i32, i32
  }
  func.func @transform_2(%arg0: i32) -> (i32, i32) {
    %c0_i32 = arith.constant 0 : i32
    %c0_i32_0 = arith.constant 0 : i32
    %c0_i32_1 = arith.constant 0 : i32
    return %c0_i32, %c0_i32_0 : i32, i32
  }
  func.func @transform_3(%arg0: i32) -> (i32, i32) {
    %c0_i32 = arith.constant 0 : i32
    %c0_i32_0 = arith.constant 0 : i32
    %c0_i32_1 = arith.constant 0 : i32
    return %c0_i32, %c0_i32_0 : i32, i32
  }
  func.func @transform_4(%arg0: i32) -> (i32, i32) {
    %c0_i32 = arith.constant 0 : i32
    %c0_i32_0 = arith.constant 0 : i32
    %c0_i32_1 = arith.constant 0 : i32
    return %c0_i32, %c0_i32_0 : i32, i32
  }
  func.func @transform_5(%arg0: i32) -> (i32, i32) {
    %c0_i32 = arith.constant 0 : i32
    %c0_i32_0 = arith.constant 0 : i32
    %c0_i32_1 = arith.constant 0 : i32
    return %c0_i32, %c0_i32_0 : i32, i32
  }
  func.func @transform_6(%arg0: i32) -> (i32, i32) {
    %c0_i32 = arith.constant 0 : i32
    %c0_i32_0 = arith.constant 0 : i32
    %c0_i32_1 = arith.constant 0 : i32
    return %c0_i32, %c0_i32_0 : i32, i32
  }
  func.func @transform_7(%arg0: i32) -> (i32, i32, i32) {
    %c0_i32 = arith.constant 0 : i32
    %c0_i32_0 = arith.constant 0 : i32
    %c0_i32_1 = arith.constant 0 : i32
    return %arg0, %c0_i32, %c0_i32_0 : i32, i32, i32
  }
}

</mosaic_0001>

<llo_original>
// kernel: fcn_forward.1
$region0: #{fcn_forward.1}
  #allocation0 [shape = 'u32[]', space=smem, size = 0x4, offset = 0x4, fixed_abs, tag = 'smem constant byte address 0x4 - core index']
  #allocation1 [shape = 'u32[144,128]{1,0:T(1,128)}', space=vmem, size = 0x12000, scoped, tag = 'internal scratch']
  #allocation2 [shape = 'f32[1,1]{1,0:T(1,128)S(1)}', space=vmem, size = 0x200, scoped, tag = 'scoped memory for fcn_forward.1']
  %s0 = inlined_call_operand.vmem [shape: bf16[2,1,4,600], index: 0, kind: input, shape index: {}]
  %s1 = inlined_call_operand.vmem [shape: bf16[4,100], index: 1, kind: input, shape index: {}]
  %s2 = inlined_call_operand.vmem [shape: f32[4,1], index: 2, kind: input, shape index: {}]
  %s3 = inlined_call_operand.vmem [shape: bf16[8,36], index: 3, kind: input, shape index: {}]
  %s4 = inlined_call_operand.vmem [shape: f32[8,1], index: 4, kind: input, shape index: {}]
  %s5 = inlined_call_operand.vmem [shape: f32[1,72], index: 5, kind: input, shape index: {}]
  %s6 = inlined_call_operand.<no memory space> [shape: f32[1,1], index: 6, kind: input, shape index: {}]
  %s7 = inlined_call_operand.vmem [shape: f32[2,1,384], index: 7, kind: output, shape index: {}]
  %s8 = sld [smem:[#allocation0]]
  $region61: #{fcn_forward.1} parent=0
    _
  %s10 = ssub.s32 1, %s8
  %s11 = scalar_select 0, %s10, %s8
  %v12 = vstv %s6
  %13 = vst [vmem:[#allocation2] sm:$0x1] %v12
  loop: start=0, step=1, limit=4
  $region2: #{fcn_forward.1} parent=0 // loop_pre_header
    _
  $region3: #{fcn_forward.1} parent=0 // loop_header
    %s15 = sphi 0, %s19
    %p16 = scmp.ge.s32.totalorder %s15, 4
    %s25 = sphi 0, %s27
    %s28 = sphi 0, %s25
    %s29 = sphi 0, %s28
    %s45 = sphi 0, %s29
    %s49 = sphi 0, %s49
    %s51 = sphi 0, %s49
    %s52 = sphi 0, %s51
    %s66 = sphi 0, %s52
    %s70 = sphi 0, %s70
    %s72 = sphi 0, %s70
    %s73 = sphi 0, %s72
    %s87 = sphi 0, %s73
    %s91 = sphi 0, %s91
    %s93 = sphi 0, %s91
    %s94 = sphi 0, %s93
    %s108 = sphi 0, %s94
    %s112 = sphi 0, %s112
    %s114 = sphi 0, %s112
    %s115 = sphi 0, %s114
    %s129 = sphi 0, %s115
    %s133 = sphi 0, %s133
    %s135 = sphi 0, %s133
    %s136 = sphi 0, %s135
    %s150 = sphi 0, %s136
    %s154 = sphi 0, %s154
    %s156 = sphi 0, %s154
    %s157 = sphi 0, %s156
    %s171 = sphi 0, %s157
    %s177 = sphi 0, %s179
    %s180 = sphi 0, %s177
    %s181 = sphi 0, %s180
    %s197 = sphi 0, %s181
  $region4: #{fcn_forward.1} parent=0 // loop_header_branch
    %18 = sbr.rel (%p16) target = $region8
  $region5: #{fcn_forward.1} parent=0 // loop_body
    %s20 = ssub.s32 %s15, 1
    %s21 = ssub.s32 %s15, 2
    %s22 = sadd.s32 %s15, 1
    %s23 = ssub.s32 %s15, %s22
    %p24 = scmp.eq.s32.totalorder %s23, 0
    %s26 = sadd.s32 %s25, 1
    %s27 = scalar_select %p24, %s25, %s26
    %p30 = pneg %p24
    %p31 = scmp.eq.s32.totalorder %s15, 1
    %p32 = por %p30, %p31
    %p33 = scmp.ne.s32.totalorder %s25, %s28
    %p34 = scmp.eq.s32.totalorder %s15, 0
    %p35 = por %p33, %p34
    %p36 = scmp.ne.s32.totalorder %s25, %s28
    %p37 = scmp.eq.s32.totalorder %s20, 1
    %p38 = por %p36, %p37
    %p39 = scmp.ne.s32.totalorder %s28, %s29
    %p40 = scmp.eq.s32.totalorder %s20, 0
    %p41 = por %p39, %p40
    %p42 = scmp.ne.s32.totalorder %s28, %s29
    %p43 = scmp.eq.s32.totalorder %s21, 1
    %p44 = por %p42, %p43
    %p46 = scmp.ne.s32.totalorder %s29, %s45
    %p47 = scmp.eq.s32.totalorder %s21, 0
    %p48 = por %p46, %p47
    %s50 = sadd.s32 %s49, 1
    %p53 = scmp.eq.s32.totalorder %s15, 1
    %p54 = scmp.ne.s32.totalorder %s49, %s51
    %p55 = scmp.eq.s32.totalorder %s15, 0
    %p56 = por %p54, %p55
    %p57 = scmp.ne.s32.totalorder %s49, %s51
    %p58 = scmp.eq.s32.totalorder %s20, 1
    %p59 = por %p57, %p58
    %p60 = scmp.ne.s32.totalorder %s51, %s52
    %p61 = scmp.eq.s32.totalorder %s20, 0
    %p62 = por %p60, %p61
    %p63 = scmp.ne.s32.totalorder %s51, %s52
    %p64 = scmp.eq.s32.totalorder %s21, 1
    %p65 = por %p63, %p64
    %p67 = scmp.ne.s32.totalorder %s52, %s66
    %p68 = scmp.eq.s32.totalorder %s21, 0
    %p69 = por %p67, %p68
    %s71 = sadd.s32 %s70, 1
    %p74 = scmp.eq.s32.totalorder %s15, 1
    %p75 = scmp.ne.s32.totalorder %s70, %s72
    %p76 = scmp.eq.s32.totalorder %s15, 0
    %p77 = por %p75, %p76
    %p78 = scmp.ne.s32.totalorder %s70, %s72
    %p79 = scmp.eq.s32.totalorder %s20, 1
    %p80 = por %p78, %p79
    %p81 = scmp.ne.s32.totalorder %s72, %s73
    %p82 = scmp.eq.s32.totalorder %s20, 0
    %p83 = por %p81, %p82
    %p84 = scmp.ne.s32.totalorder %s72, %s73
    %p85 = scmp.eq.s32.totalorder %s21, 1
    %p86 = por %p84, %p85
    %p88 = scmp.ne.s32.totalorder %s73, %s87
    %p89 = scmp.eq.s32.totalorder %s21, 0
    %p90 = por %p88, %p89
    %s92 = sadd.s32 %s91, 1
    %p95 = scmp.eq.s32.totalorder %s15, 1
    %p96 = scmp.ne.s32.totalorder %s91, %s93
    %p97 = scmp.eq.s32.totalorder %s15, 0
    %p98 = por %p96, %p97
    %p99 = scmp.ne.s32.totalorder %s91, %s93
    %p100 = scmp.eq.s32.totalorder %s20, 1
    %p101 = por %p99, %p100
    %p102 = scmp.ne.s32.totalorder %s93, %s94
    %p103 = scmp.eq.s32.totalorder %s20, 0
    %p104 = por %p102, %p103
    %p105 = scmp.ne.s32.totalorder %s93, %s94
    %p106 = scmp.eq.s32.totalorder %s21, 1
    %p107 = por %p105, %p106
    %p109 = scmp.ne.s32.totalorder %s94, %s108
    %p110 = scmp.eq.s32.totalorder %s21, 0
    %p111 = por %p109, %p110
    %s113 = sadd.s32 %s112, 1
    %p116 = scmp.eq.s32.totalorder %s15, 1
    %p117 = scmp.ne.s32.totalorder %s112, %s114
    %p118 = scmp.eq.s32.totalorder %s15, 0
    %p119 = por %p117, %p118
    %p120 = scmp.ne.s32.totalorder %s112, %s114
    %p121 = scmp.eq.s32.totalorder %s20, 1
    %p122 = por %p120, %p121
    %p123 = scmp.ne.s32.totalorder %s114, %s115
    %p124 = scmp.eq.s32.totalorder %s20, 0
    %p125 = por %p123, %p124
    %p126 = scmp.ne.s32.totalorder %s114, %s115
    %p127 = scmp.eq.s32.totalorder %s21, 1
    %p128 = por %p126, %p127
    %p130 = scmp.ne.s32.totalorder %s115, %s129
    %p131 = scmp.eq.s32.totalorder %s21, 0
    %p132 = por %p130, %p131
    %s134 = sadd.s32 %s133, 1
    %p137 = scmp.eq.s32.totalorder %s15, 1
    %p138 = scmp.ne.s32.totalorder %s133, %s135
    %p139 = scmp.eq.s32.totalorder %s15, 0
    %p140 = por %p138, %p139
    %p141 = scmp.ne.s32.totalorder %s133, %s135
    %p142 = scmp.eq.s32.totalorder %s20, 1
    %p143 = por %p141, %p142
    %p144 = scmp.ne.s32.totalorder %s135, %s136
    %p145 = scmp.eq.s32.totalorder %s20, 0
    %p146 = por %p144, %p145
    %p147 = scmp.ne.s32.totalorder %s135, %s136
    %p148 = scmp.eq.s32.totalorder %s21, 1
    %p149 = por %p147, %p148
    %p151 = scmp.ne.s32.totalorder %s136, %s150
    %p152 = scmp.eq.s32.totalorder %s21, 0
    %p153 = por %p151, %p152
    %s155 = sadd.s32 %s154, 1
    %p158 = scmp.eq.s32.totalorder %s15, 1
    %p159 = scmp.ne.s32.totalorder %s154, %s156
    %p160 = scmp.eq.s32.totalorder %s15, 0
    %p161 = por %p159, %p160
    %p162 = scmp.ne.s32.totalorder %s154, %s156
    %p163 = scmp.eq.s32.totalorder %s20, 1
    %p164 = por %p162, %p163
    %p165 = scmp.ne.s32.totalorder %s156, %s157
    %p166 = scmp.eq.s32.totalorder %s20, 0
    %p167 = por %p165, %p166
    %p168 = scmp.ne.s32.totalorder %s156, %s157
    %p169 = scmp.eq.s32.totalorder %s21, 1
    %p170 = por %p168, %p169
    %p172 = scmp.ne.s32.totalorder %s157, %s171
    %p173 = scmp.eq.s32.totalorder %s21, 0
    %p174 = por %p172, %p173
    %s175 = ssub.s32 %s15, %s22
    %p176 = scmp.eq.s32.totalorder %s175, 0
    %s178 = sadd.s32 %s177, 1
    %s179 = scalar_select %p176, %s177, %s178
    %p182 = pneg %p176
    %p183 = scmp.eq.s32.totalorder %s15, 1
    %p184 = por %p182, %p183
    %p185 = scmp.ne.s32.totalorder %s177, %s180
    %p186 = scmp.eq.s32.totalorder %s15, 0
    %p187 = por %p185, %p186
    %p188 = scmp.ne.s32.totalorder %s177, %s180
    %p189 = scmp.eq.s32.totalorder %s20, 1
    %p190 = por %p188, %p189
    %p191 = scmp.ne.s32.totalorder %s180, %s181
    %p192 = scmp.eq.s32.totalorder %s20, 0
    %p193 = por %p191, %p192
    %p194 = scmp.ne.s32.totalorder %s180, %s181
    %p195 = scmp.eq.s32.totalorder %s21, 1
    %p196 = por %p194, %p195
    %p198 = scmp.ne.s32.totalorder %s181, %s197
    %p199 = scmp.eq.s32.totalorder %s21, 0
    %p200 = por %p198, %p199
    %p201 = scmp.le.s32.totalorder 1, %s15
    %p202 = scmp.lt.s32.totalorder %s15, 3
    %p203 = pnand %p201, %p202
    %p204 = pneg %p203
    // Predicated region
    $region9: #{fcn_forward.1} parent=5 // pred_check
      _
    $region10: #{fcn_forward.1} parent=5 // pred_check_branch
      %206 = sbr.rel (%p203) target = $region12
    $region11: #{fcn_forward.1} parent=5 // pred_region
      %s207 = ssub.s32 %s15, 1
      // Predicated region
      $region13: #{fcn_forward.1} parent=11 // pred_check
        %p208 = pneg %p62
      $region14: #{fcn_forward.1} parent=11 // pred_check_branch
        %210 = sbr.rel (%p208) target = $region16
      $region15: #{fcn_forward.1} parent=11 // pred_region
        _
      $region16: #{fcn_forward.1} parent=11 // pred_fallthru
        _
      // Predicated region
      $region17: #{fcn_forward.1} parent=11 // pred_check
        %p211 = pneg %p83
      $region18: #{fcn_forward.1} parent=11 // pred_check_branch
        %213 = sbr.rel (%p211) target = $region20
      $region19: #{fcn_forward.1} parent=11 // pred_region
        _
      $region20: #{fcn_forward.1} parent=11 // pred_fallthru
        _
      // Predicated region
      $region21: #{fcn_forward.1} parent=11 // pred_check
        %p214 = pneg %p104
      $region22: #{fcn_forward.1} parent=11 // pred_check_branch
        %216 = sbr.rel (%p214) target = $region24
      $region23: #{fcn_forward.1} parent=11 // pred_region
        _
      $region24: #{fcn_forward.1} parent=11 // pred_fallthru
        _
      // Predicated region
      $region25: #{fcn_forward.1} parent=11 // pred_check
        %p217 = pneg %p125
      $region26: #{fcn_forward.1} parent=11 // pred_check_branch
        %219 = sbr.rel (%p217) target = $region28
      $region27: #{fcn_forward.1} parent=11 // pred_region
        _
      $region28: #{fcn_forward.1} parent=11 // pred_fallthru
        _
      // Predicated region
      $region29: #{fcn_forward.1} parent=11 // pred_check
        %p220 = pneg %p146
      $region30: #{fcn_forward.1} parent=11 // pred_check_branch
        %222 = sbr.rel (%p220) target = $region32
      $region31: #{fcn_forward.1} parent=11 // pred_region
        _
      $region32: #{fcn_forward.1} parent=11 // pred_fallthru
        _
      // Predicated region
      $region33: #{fcn_forward.1} parent=11 // pred_check
        %p223 = pneg %p167
      $region34: #{fcn_forward.1} parent=11 // pred_check_branch
        %225 = sbr.rel (%p223) target = $region36
      $region35: #{fcn_forward.1} parent=11 // pred_region
        _
      $region36: #{fcn_forward.1} parent=11 // pred_fallthru
        _
    $region12: #{fcn_forward.1} parent=5 // pred_fallthru
      _
    %p226 = scmp.lt.s32.totalorder %s15, 2
    // Predicated region
    $region37: #{fcn_forward.1} parent=5 // pred_check
      %p227 = pneg %p226
    $region38: #{fcn_forward.1} parent=5 // pred_check_branch
      %229 = sbr.rel (%p227) target = $region40
    $region39: #{fcn_forward.1} parent=5 // pred_region
      // Predicated region
      $region41: #{fcn_forward.1} parent=39 // pred_check
        %p230 = pneg %p35
      $region42: #{fcn_forward.1} parent=39 // pred_check_branch
        %232 = sbr.rel (%p230) target = $region44
      $region43: #{fcn_forward.1} parent=39 // pred_region
        %p233 = scmp.lt.s32.totalorder %s15, 1
        %s234 = scalar_select %p233, %s15, 1
        %s235 = smul.addr %s234, 5
        %s236 = smul.addr %s235, 2
        %s237 = scalar_lea.vmem %s0, %s236
      $region44: #{fcn_forward.1} parent=39 // pred_fallthru
        _
    $region40: #{fcn_forward.1} parent=5 // pred_fallthru
      _
    %p238 = scmp.le.s32.totalorder 1, %s15
    %p239 = scmp.lt.s32.totalorder %s15, 3
    %p240 = pnand %p238, %p239
    %p241 = pneg %p240
    // Predicated region
    $region45: #{fcn_forward.1} parent=5 // pred_check
      _
    $region46: #{fcn_forward.1} parent=5 // pred_check_branch
      %243 = sbr.rel (%p240) target = $region48
    $region47: #{fcn_forward.1} parent=5 // pred_region
      %s244 = ssub.s32 %s15, 1
      %p245 = scmp.lt.s32.totalorder %s20, 1
      %s246 = scalar_select %p245, %s20, 1
      %s247 = smul.addr %s246, 5
      %s248 = smul.addr %s247, 2
      %s249 = scalar_lea.vmem %s0, %s248
      %p250 = pneg %p41
      %p251 = pneg %p38
      %p252 = pneg %p62
      %p253 = pneg %p59
      %p254 = pneg %p83
      %p255 = pneg %p80
      %p256 = pneg %p104
      %p257 = pneg %p101
      %p258 = pneg %p125
      %p259 = pneg %p122
      %p260 = pneg %p146
      %p261 = pneg %p143
      %p262 = pneg %p167
      %p263 = pneg %p164
      %p264 = pneg %p193
      %p265 = pneg %p190
      %p266 = scmp.lt.s32.totalorder %s20, 1
      %s267 = scalar_select %p266, %s20, 1
      %s268 = smul.addr %s267, 3
      %s269 = scalar_lea.vmem %s7, %s268
      %p270 = scmp.lt.s32.totalorder %s20, 1
      %s271 = scalar_select %p270, %s20, 1
      %s272 = smul.addr %s271, 5
      %s273 = smul.addr %s272, 2
      %s274 = scalar_lea.vmem %s0, %s273
      %p275 = scmp.lt.s32.totalorder %s20, 1
      %s276 = scalar_select %p275, %s20, 1
      %s277 = smul.addr %s276, 3
      %s278 = scalar_lea.vmem %s7, %s277
      %v280 = vld [vmem:[%s1] sm:$0x3]
      %v281 = vld [vmem:[%s2] sm:$0xf]
      %v282 = vld [vmem:[%s3] sm:$0xf]
      %v283 = vld [vmem:[%s4] sm:$0xff]
      %v284 = vld [vmem:[%s5] sm:$0x1]
      %v285 = vld [vmem:[#allocation2] sm:$0x1]
      %v286 = vld [vmem:[%s274] sm:$0xff]
      %v287 = vld [vmem:[%s274 + $0x8] sm:$0x3]
      %v289 = vcombine.high %v286, %v286
      %v291 = vunpack.c.l.s4 1983009808
      %v292 = vunpack.c.0.s8 %v291
      %v293 = vlaneseq
      %v294 = vshrl.u32 %v293, 7
      %v295 = vsub.s32 %v292, %v294
      %v296 = vrot.slane %v286, %v295
      %v298 = vunpack.c.l.s4 1983009808
      %v299 = vunpack.c.0.s8 %v298
      %v300 = vlaneseq
      %v301 = vshrl.u32 %v300, 7
      %v302 = vsub.s32 %v299, %v301
      %v303 = vrot.slane %v289, %v302
      %v304 = vcombine.high %v296, %v296
      %v305 = vcombine.high %v303, %v303
      %v306 = vcombine.low %v286, %v286
      %v308 = vunpack.c.l.s4 1983009808
      %v309 = vunpack.c.0.s8 %v308
      %v310 = vlaneseq
      %v311 = vshrl.u32 %v310, 7
      %v312 = vsub.s32 %v309, %v311
      %v313 = vrot.slane %v306, %v312
      %v314 = vcombine.high %v313, %v313
      %315 = vrot.lane.b32.xlu0 %v313, 127
      %v316 = vpop.permute.xlu0 %315
      %317 = vrot.lane.b32.xlu0 %v314, 127
      %v318 = vpop.permute.xlu0 %317
      %319 = vrot.lane.b32.xlu0 %v296, 127
      %v320 = vpop.permute.xlu0 %319
      %321 = vrot.lane.b32.xlu0 %v304, 127
      %v322 = vpop.permute.xlu0 %321
      %vm323 = vcmask 1039360
      %v324 = vsel %vm323, %v316, %v318
      %v325 = vsel %vm323, %v318, %v320
      %v326 = vsel %vm323, %v320, %v322
      %v327 = vcombine.low %v296, %v296
      %v328 = vcombine.low %v303, %v303
      %329 = vrot.lane.b32.xlu0 %v327, 126
      %v330 = vpop.permute.xlu0 %329
      %331 = vrot.lane.b32.xlu0 %v296, 126
      %v332 = vpop.permute.xlu0 %331
      %333 = vrot.lane.b32.xlu0 %v328, 126
      %v334 = vpop.permute.xlu0 %333
      %335 = vrot.lane.b32.xlu0 %v303, 126
      %v336 = vpop.permute.xlu0 %335
      %vm337 = vcmask 1031168
      %v338 = vsel %vm337, %v330, %v332
      %v339 = vsel %vm337, %v332, %v334
      %v340 = vsel %vm337, %v334, %v336
      %v341 = vcombine.low %v313, %v313
      %342 = vrot.lane.b32.xlu0 %v341, 125
      %v343 = vpop.permute.xlu0 %342
      %344 = vrot.lane.b32.xlu0 %v313, 125
      %v345 = vpop.permute.xlu0 %344
      %346 = vrot.lane.b32.xlu0 %v327, 125
      %v347 = vpop.permute.xlu0 %346
      %348 = vrot.lane.b32.xlu0 %v296, 125
      %v349 = vpop.permute.xlu0 %348
      %vm350 = vcmask 1022976
      %v351 = vsel %vm350, %v343, %v345
      %v352 = vsel %vm350, %v345, %v347
      %v353 = vsel %vm350, %v347, %v349
      %354 = vrot.lane.b32.xlu0 %v296, 124
      %v355 = vpop.permute.xlu0 %354
      %356 = vrot.lane.b32.xlu0 %v304, 124
      %v357 = vpop.permute.xlu0 %356
      %358 = vrot.lane.b32.xlu0 %v303, 124
      %v359 = vpop.permute.xlu0 %358
      %360 = vrot.lane.b32.xlu0 %v305, 124
      %v361 = vpop.permute.xlu0 %360
      %vm362 = vcmask 1014784
      %v363 = vsel %vm362, %v355, %v357
      %v364 = vsel %vm362, %v357, %v359
      %v365 = vsel %vm362, %v359, %v361
      %366 = vrot.lane.b32.xlu0 %v313, 104
      %v367 = vpop.permute.xlu0 %366
      %368 = vrot.lane.b32.xlu0 %v314, 104
      %v369 = vpop.permute.xlu0 %368
      %370 = vrot.lane.b32.xlu0 %v296, 104
      %v371 = vpop.permute.xlu0 %370
      %372 = vrot.lane.b32.xlu0 %v304, 104
      %v373 = vpop.permute.xlu0 %372
      %vm374 = vcmask 850944
      %v375 = vsel %vm374, %v367, %v369
      %v376 = vsel %vm374, %v369, %v371
      %v377 = vsel %vm374, %v371, %v373
      %378 = vrot.lane.b32.xlu0 %v327, 103
      %v379 = vpop.permute.xlu0 %378
      %380 = vrot.lane.b32.xlu0 %v296, 103
      %v381 = vpop.permute.xlu0 %380
      %382 = vrot.lane.b32.xlu0 %v328, 103
      %v383 = vpop.permute.xlu0 %382
      %384 = vrot.lane.b32.xlu0 %v303, 103
      %v385 = vpop.permute.xlu0 %384
      %vm386 = vcmask 842752
      %v387 = vsel %vm386, %v379, %v381
      %v388 = vsel %vm386, %v381, %v383
      %v389 = vsel %vm386, %v383, %v385
      %390 = vrot.lane.b32.xlu0 %v341, 102
      %v391 = vpop.permute.xlu0 %390
      %392 = vrot.lane.b32.xlu0 %v313, 102
      %v393 = vpop.permute.xlu0 %392
      %394 = vrot.lane.b32.xlu0 %v327, 102
      %v395 = vpop.permute.xlu0 %394
      %396 = vrot.lane.b32.xlu0 %v296, 102
      %v397 = vpop.permute.xlu0 %396
      %vm398 = vcmask 834560
      %v399 = vsel %vm398, %v391, %v393
      %v400 = vsel %vm398, %v393, %v395
      %v401 = vsel %vm398, %v395, %v397
      %402 = vrot.lane.b32.xlu0 %v296, 101
      %v403 = vpop.permute.xlu0 %402
      %404 = vrot.lane.b32.xlu0 %v304, 101
      %v405 = vpop.permute.xlu0 %404
      %406 = vrot.lane.b32.xlu0 %v303, 101
      %v407 = vpop.permute.xlu0 %406
      %408 = vrot.lane.b32.xlu0 %v305, 101
      %v409 = vpop.permute.xlu0 %408
      %vm410 = vcmask 826368
      %v411 = vsel %vm410, %v403, %v405
      %v412 = vsel %vm410, %v405, %v407
      %v413 = vsel %vm410, %v407, %v409
      %414 = vrot.lane.b32.xlu0 %v313, 100
      %v415 = vpop.permute.xlu0 %414
      %416 = vrot.lane.b32.xlu0 %v314, 100
      %v417 = vpop.permute.xlu0 %416
      %418 = vrot.lane.b32.xlu0 %v296, 100
      %v419 = vpop.permute.xlu0 %418
      %420 = vrot.lane.b32.xlu0 %v304, 100
      %v421 = vpop.permute.xlu0 %420
      %vm422 = vcmask 818176
      %v423 = vsel %vm422, %v415, %v417
      %v424 = vsel %vm422, %v417, %v419
      %v425 = vsel %vm422, %v419, %v421
      %v428 = vunpack.c.l.s4 1983009808
      %v429 = vunpack.c.0.s8 %v428
      %v430 = vlaneseq
      %v431 = vshrl.u32 %v430, 7
      %v432 = vsub.s32 %v429, %v431
      %v433 = vrot.slane %v287, %v432
      %v434 = vcombine.low %v433, %v433
      %435 = vrot.lane.b32.xlu0 %v327, 80
      %v436 = vpop.permute.xlu0 %435
      %437 = vrot.lane.b32.xlu0 %v296, 80
      %v438 = vpop.permute.xlu0 %437
      %439 = vrot.lane.b32.xlu0 %v328, 80
      %v440 = vpop.permute.xlu0 %439
      %441 = vrot.lane.b32.xlu0 %v303, 80
      %v442 = vpop.permute.xlu0 %441
      %443 = vrot.lane.b32.xlu0 %v434, 80
      %v444 = vpop.permute.xlu0 %443
      %vm445 = vcmask 654336
      %v446 = vsel %vm445, %v436, %v438
      %v447 = vsel %vm445, %v438, %v440
      %v448 = vsel %vm445, %v440, %v442
      %v449 = vsel %vm445, %v442, %v444
      %v450 = vcombine.low %v287, %v287
      %v452 = vunpack.c.l.s4 1983009808
      %v453 = vunpack.c.0.s8 %v452
      %v454 = vlaneseq
      %v455 = vshrl.u32 %v454, 7
      %v456 = vsub.s32 %v453, %v455
      %v457 = vrot.slane %v450, %v456
      %v458 = vcombine.low %v457, %v457
      %459 = vrot.lane.b32.xlu0 %v341, 79
      %v460 = vpop.permute.xlu0 %459
      %461 = vrot.lane.b32.xlu0 %v313, 79
      %v462 = vpop.permute.xlu0 %461
      %463 = vrot.lane.b32.xlu0 %v327, 79
      %v464 = vpop.permute.xlu0 %463
      %465 = vrot.lane.b32.xlu0 %v296, 79
      %v466 = vpop.permute.xlu0 %465
      %467 = vrot.lane.b32.xlu0 %v458, 79
      %v468 = vpop.permute.xlu0 %467
      %vm469 = vcmask 646144
      %v470 = vsel %vm469, %v460, %v462
      %v471 = vsel %vm469, %v462, %v464
      %v472 = vsel %vm469, %v464, %v466
      %v473 = vsel %vm469, %v466, %v468
      %474 = vrot.lane.b32.xlu0 %v296, 78
      %v475 = vpop.permute.xlu0 %474
      %476 = vrot.lane.b32.xlu0 %v304, 78
      %v477 = vpop.permute.xlu0 %476
      %478 = vrot.lane.b32.xlu0 %v303, 78
      %v479 = vpop.permute.xlu0 %478
      %480 = vrot.lane.b32.xlu0 %v305, 78
      %v481 = vpop.permute.xlu0 %480
      %482 = vrot.lane.b32.xlu0 %v433, 78
      %v483 = vpop.permute.xlu0 %482
      %vm484 = vcmask 637952
      %v485 = vsel %vm484, %v475, %v477
      %v486 = vsel %vm484, %v477, %v479
      %v487 = vsel %vm484, %v479, %v481
      %v488 = vsel %vm484, %v481, %v483
      %489 = vrot.lane.b32.xlu0 %v313, 77
      %v490 = vpop.permute.xlu0 %489
      %491 = vrot.lane.b32.xlu0 %v314, 77
      %v492 = vpop.permute.xlu0 %491
      %493 = vrot.lane.b32.xlu0 %v296, 77
      %v494 = vpop.permute.xlu0 %493
      %495 = vrot.lane.b32.xlu0 %v304, 77
      %v496 = vpop.permute.xlu0 %495
      %497 = vrot.lane.b32.xlu0 %v457, 77
      %v498 = vpop.permute.xlu0 %497
      %vm499 = vcmask 629760
      %v500 = vsel %vm499, %v490, %v492
      %v501 = vsel %vm499, %v492, %v494
      %v502 = vsel %vm499, %v494, %v496
      %v503 = vsel %vm499, %v496, %v498
      %504 = vrot.lane.b32.xlu0 %v327, 76
      %v505 = vpop.permute.xlu0 %504
      %506 = vrot.lane.b32.xlu0 %v296, 76
      %v507 = vpop.permute.xlu0 %506
      %508 = vrot.lane.b32.xlu0 %v328, 76
      %v509 = vpop.permute.xlu0 %508
      %510 = vrot.lane.b32.xlu0 %v303, 76
      %v511 = vpop.permute.xlu0 %510
      %512 = vrot.lane.b32.xlu0 %v434, 76
      %v513 = vpop.permute.xlu0 %512
      %vm514 = vcmask 621568
      %v515 = vsel %vm514, %v505, %v507
      %v516 = vsel %vm514, %v507, %v509
      %v517 = vsel %vm514, %v509, %v511
      %v518 = vsel %vm514, %v511, %v513
      %519 = vrot.lane.b32.xlu0 %v341, 56
      %v520 = vpop.permute.xlu0 %519
      %521 = vrot.lane.b32.xlu0 %v313, 56
      %v522 = vpop.permute.xlu0 %521
      %523 = vrot.lane.b32.xlu0 %v327, 56
      %v524 = vpop.permute.xlu0 %523
      %525 = vrot.lane.b32.xlu0 %v296, 56
      %v526 = vpop.permute.xlu0 %525
      %527 = vrot.lane.b32.xlu0 %v458, 56
      %v528 = vpop.permute.xlu0 %527
      %vm529 = vcmask 457728
      %v530 = vsel %vm529, %v520, %v522
      %v531 = vsel %vm529, %v522, %v524
      %v532 = vsel %vm529, %v524, %v526
      %v533 = vsel %vm529, %v526, %v528
      %vm534 = vcmask 1041408
      %v537 = vsel %vm534, %v296, %v324
      %v540 = vsel %vm534, %v304, %v325
      %v543 = vsel %vm534, %v303, %v326
      %v546 = vsel %vm534, %v305, %v322
      %vm547 = vcmask 1043456
      %v549 = vsel %vm547, %v537, %v338
      %v551 = vsel %vm547, %v540, %v339
      %v553 = vsel %vm547, %v543, %v340
      %v555 = vsel %vm547, %v546, %v336
      %vm556 = vcmask 1045504
      %v558 = vsel %vm556, %v549, %v351
      %v561 = vsel %vm556, %v551, %v352
      %v564 = vsel %vm556, %v553, %v353
      %v567 = vsel %vm556, %v555, %v349
      %v571 = vsel %vm534, %v363, %v375
      %v574 = vsel %vm534, %v364, %v376
      %v577 = vsel %vm534, %v365, %v377
      %v580 = vsel %vm534, %v361, %v373
      %v582 = vsel %vm547, %v571, %v387
      %v584 = vsel %vm547, %v574, %v388
      %v586 = vsel %vm547, %v577, %v389
      %v588 = vsel %vm547, %v580, %v385
      %v590 = vsel %vm556, %v582, %v399
      %v593 = vsel %vm556, %v584, %v400
      %v596 = vsel %vm556, %v586, %v401
      %v599 = vsel %vm556, %v588, %v397
      %v603 = vsel %vm534, %v411, %v423
      %v606 = vsel %vm534, %v412, %v424
      %v609 = vsel %vm534, %v413, %v425
      %v612 = vsel %vm534, %v409, %v421
      %v614 = vsel %vm547, %v603, %v446
      %v616 = vsel %vm547, %v606, %v447
      %v618 = vsel %vm547, %v609, %v448
      %v620 = vsel %vm547, %v612, %v449
      %v622 = vsel %vm556, %v614, %v470
      %v625 = vsel %vm556, %v616, %v471
      %v628 = vsel %vm556, %v618, %v472
      %v631 = vsel %vm556, %v620, %v473
      %v635 = vsel %vm534, %v485, %v500
      %v638 = vsel %vm534, %v486, %v501
      %v641 = vsel %vm534, %v487, %v502
      %v644 = vsel %vm534, %v488, %v503
      %v646 = vsel %vm547, %v635, %v515
      %v648 = vsel %vm547, %v638, %v516
      %v650 = vsel %vm547, %v641, %v517
      %v652 = vsel %vm547, %v644, %v518
      %v654 = vsel %vm556, %v646, %v530
      %v657 = vsel %vm556, %v648, %v531
      %v660 = vsel %vm556, %v650, %v532
      %v663 = vsel %vm556, %v652, %v533
      %665 = vrot.lane.b32.xlu0 %v457, 127
      %v666 = vpop.permute.xlu0 %665
      %v667 = vsel %vm323, %v322, %v666
      %668 = vrot.lane.b32.xlu0 %v434, 126
      %v669 = vpop.permute.xlu0 %668
      %v670 = vsel %vm337, %v336, %v669
      %671 = vrot.lane.b32.xlu0 %v458, 125
      %v672 = vpop.permute.xlu0 %671
      %v673 = vsel %vm350, %v349, %v672
      %674 = vrot.lane.b32.xlu0 %v296, 105
      %v675 = vpop.permute.xlu0 %674
      %676 = vrot.lane.b32.xlu0 %v304, 105
      %v677 = vpop.permute.xlu0 %676
      %678 = vrot.lane.b32.xlu0 %v303, 105
      %v679 = vpop.permute.xlu0 %678
      %680 = vrot.lane.b32.xlu0 %v305, 105
      %v681 = vpop.permute.xlu0 %680
      %682 = vrot.lane.b32.xlu0 %v433, 105
      %v683 = vpop.permute.xlu0 %682
      %vm684 = vcmask 859136
      %v685 = vsel %vm684, %v675, %v677
      %v686 = vsel %vm684, %v677, %v679
      %v687 = vsel %vm684, %v679, %v681
      %v688 = vsel %vm684, %v681, %v683
      %689 = vrot.lane.b32.xlu0 %v457, 104
      %v690 = vpop.permute.xlu0 %689
      %v691 = vsel %vm374, %v373, %v690
      %692 = vrot.lane.b32.xlu0 %v434, 103
      %v693 = vpop.permute.xlu0 %692
      %v694 = vsel %vm386, %v385, %v693
      %695 = vrot.lane.b32.xlu0 %v458, 102
      %v696 = vpop.permute.xlu0 %695
      %v697 = vsel %vm398, %v397, %v696
      %698 = vrot.lane.b32.xlu0 %v433, 101
      %v699 = vpop.permute.xlu0 %698
      %v700 = vsel %vm410, %v409, %v699
      %v702 = vsel %vm534, %v305, %v667
      %v705 = vsel %vm534, %v433, %v666
      %v707 = vsel %vm547, %v702, %v670
      %v709 = vsel %vm547, %v705, %v669
      %v711 = vsel %vm556, %v707, %v673
      %v713 = vsel %vm556, %v709, %v672
      %v715 = vsel %vm534, %v685, %v375
      %v717 = vsel %vm534, %v686, %v376
      %v719 = vsel %vm534, %v687, %v377
      %v722 = vsel %vm534, %v688, %v691
      %v725 = vsel %vm534, %v683, %v690
      %v726 = vsel %vm547, %v715, %v387
      %v727 = vsel %vm547, %v717, %v388
      %v728 = vsel %vm547, %v719, %v389
      %v730 = vsel %vm547, %v722, %v694
      %v732 = vsel %vm547, %v725, %v693
      %v733 = vsel %vm556, %v726, %v399
      %v734 = vsel %vm556, %v727, %v400
      %v735 = vsel %vm556, %v728, %v401
      %v737 = vsel %vm556, %v730, %v697
      %v739 = vsel %vm556, %v732, %v696
      %750 = vrot.lane.b32.xlu0 %v558, 55
      %v751 = vpop.permute.xlu0 %750
      %752 = vrot.lane.b32.xlu0 %v561, 55
      %v753 = vpop.permute.xlu0 %752
      %754 = vrot.lane.b32.xlu0 %v564, 55
      %v755 = vpop.permute.xlu0 %754
      %756 = vrot.lane.b32.xlu0 %v711, 55
      %v757 = vpop.permute.xlu0 %756
      %758 = vrot.lane.b32.xlu0 %v713, 55
      %v759 = vpop.permute.xlu0 %758
      %760 = vrot.lane.b32.xlu0 %v733, 55
      %v761 = vpop.permute.xlu0 %760
      %762 = vrot.lane.b32.xlu0 %v734, 55
      %v763 = vpop.permute.xlu0 %762
      %764 = vrot.lane.b32.xlu0 %v735, 55
      %v765 = vpop.permute.xlu0 %764
      %766 = vrot.lane.b32.xlu0 %v737, 55
      %v767 = vpop.permute.xlu0 %766
      %768 = vrot.lane.b32.xlu0 %v739, 55
      %v769 = vpop.permute.xlu0 %768
      %770 = vrot.lane.b32.xlu0 %v411, 55
      %v771 = vpop.permute.xlu0 %770
      %772 = vrot.lane.b32.xlu0 %v412, 55
      %v773 = vpop.permute.xlu0 %772
      %774 = vrot.lane.b32.xlu0 %v413, 55
      %v775 = vpop.permute.xlu0 %774
      %776 = vrot.lane.b32.xlu0 %v700, 55
      %v777 = vpop.permute.xlu0 %776
      %778 = vrot.lane.b32.xlu0 %v699, 55
      %v779 = vpop.permute.xlu0 %778
      %vm780 = vcmask 449536
      %v781 = vsel %vm780, %v751, %v753
      %v782 = vsel %vm780, %v753, %v755
      %v783 = vsel %vm780, %v755, %v757
      %v784 = vsel %vm780, %v757, %v759
      %v785 = vsel %vm780, %v761, %v763
      %v786 = vsel %vm780, %v763, %v765
      %v787 = vsel %vm780, %v765, %v767
      %v788 = vsel %vm780, %v767, %v769
      %v789 = vsel %vm780, %v771, %v773
      %v790 = vsel %vm780, %v773, %v775
      %v791 = vsel %vm780, %v775, %v777
      %v792 = vsel %vm780, %v777, %v779
      %802 = vset.pattern.permute.xlu0 0
      %803 = vperm.xlu0 %802, %v281
      %v804 = vpop.permute.xlu0 %803
      %vm806 = vcmask 818176
      %v808 = vsel %vm806, %v280, 0
      %v811 = vsel %vm534, %v789, 0
      %v814 = vsel %vm534, %v790, 0
      %v817 = vsel %vm534, %v791, 0
      %v820 = vsel %vm534, %v792, 0
      %822 = vmatprep.subr.bf16.mxu0 0
      %823 = vmatpush1.bf16.msra.mxu0 0
      %824 = vmatprep.subr.bf16.mxu0 %v814
      %825 = vmatpush1.bf16.msra.mxu0 %v811
      %826 = vmatprep.subr.bf16.mxu0 %v786
      %827 = vmatpush1.bf16.msra.mxu0 %v785
      %828 = vmatprep.subr.bf16.mxu0 %v782
      %829 = vmatpush1.bf16.msra.mxu0 %v781
      %830 = vmatprep.subr.bf16.mxu0 %v657
      %831 = vmatpush1.bf16.msra.mxu0 %v654
      %832 = vmatprep.subr.bf16.mxu0 %v625
      %833 = vmatpush1.bf16.msra.mxu0 %v622
      %834 = vmatprep.subr.bf16.mxu0 %v593
      %835 = vmatpush1.bf16.msra.mxu0 %v590
      %836 = vmatprep.subr.bf16.mxu0 %v561
      %837 = vmatpush1.bf16.msra.mxu0 %v558
      %838 = vmatprep.subr.bf16.mxu0 0
      %839 = vmatpush2.bf16.msra.mxu0 0
      %840 = vmatprep.subr.bf16.mxu0 0
      %841 = vmatpush2.bf16.msra.mxu0 0
      %842 = vmatprep.subr.bf16.mxu0 0
      %843 = vmatpush2.bf16.msra.mxu0 0
      %844 = vmatprep.subr.bf16.mxu0 0
      %845 = vmatpush2.bf16.msra.mxu0 0
      %846 = vmatprep.subr.bf16.mxu0 0
      %847 = vmatpush2.bf16.msra.mxu0 0
      %848 = vmatprep.subr.bf16.mxu0 0
      %849 = vmatpush2.bf16.msra.mxu0 0
      %850 = vmatprep.subr.bf16.mxu0 0
      %851 = vmatpush2.bf16.msra.mxu0 0
      %852 = vmatprep.subr.bf16.mxu0 0
      %853 = vmatpush2.bf16.msra.mxu0 0
      %854 = vmatprep.mubr.bf16.mxu0 0
      %855 = vmatmul.mubr.bf16.gmra.mxu0 %v808
      %v856 = vpop.f32.mrf.mxu0
      %v857 = vadd.f32 %v804, %v856
      %v858 = vpop.f32.mrf.mxu0
      %v859 = vadd.f32 %v804, %v858
      %v860 = vpop.f32.mrf.mxu0
      %v861 = vpop.f32.mrf.mxu0
      %862 = vdwg.mxu0
      %863 = vmatprep.subr.bf16.mxu0 0
      %864 = vmatpush1.bf16.msra.mxu0 0
      %865 = vmatprep.subr.bf16.mxu0 %v820
      %866 = vmatpush1.bf16.msra.mxu0 %v817
      %867 = vmatprep.subr.bf16.mxu0 %v788
      %868 = vmatpush1.bf16.msra.mxu0 %v787
      %869 = vmatprep.subr.bf16.mxu0 %v784
      %870 = vmatpush1.bf16.msra.mxu0 %v783
      %871 = vmatprep.subr.bf16.mxu0 %v663
      %872 = vmatpush1.bf16.msra.mxu0 %v660
      %873 = vmatprep.subr.bf16.mxu0 %v631
      %874 = vmatpush1.bf16.msra.mxu0 %v628
      %875 = vmatprep.subr.bf16.mxu0 %v599
      %876 = vmatpush1.bf16.msra.mxu0 %v596
      %877 = vmatprep.subr.bf16.mxu0 %v567
      %878 = vmatpush1.bf16.msra.mxu0 %v564
      %879 = vmatprep.subr.bf16.mxu0 0
      %880 = vmatpush2.bf16.msra.mxu0 0
      %881 = vmatprep.subr.bf16.mxu0 0
      %882 = vmatpush2.bf16.msra.mxu0 0
      %883 = vmatprep.subr.bf16.mxu0 0
      %884 = vmatpush2.bf16.msra.mxu0 0
      %885 = vmatprep.subr.bf16.mxu0 0
      %886 = vmatpush2.bf16.msra.mxu0 0
      %887 = vmatprep.subr.bf16.mxu0 0
      %888 = vmatpush2.bf16.msra.mxu0 0
      %889 = vmatprep.subr.bf16.mxu0 0
      %890 = vmatpush2.bf16.msra.mxu0 0
      %891 = vmatprep.subr.bf16.mxu0 0
      %892 = vmatpush2.bf16.msra.mxu0 0
      %893 = vmatprep.subr.bf16.mxu0 0
      %894 = vmatpush2.bf16.msra.mxu0 0
      %895 = vmatprep.mubr.bf16.mxu0 0
      %896 = vmatmul.mubr.bf16.gmra.mxu0 %v808
      %v897 = vpop.f32.mrf.mxu0
      %v898 = vadd.f32 %v804, %v897
      %v899 = vpop.f32.mrf.mxu0
      %v900 = vadd.f32 %v804, %v899
      %v901 = vpop.f32.mrf.mxu0
      %v902 = vpop.f32.mrf.mxu0
      %903 = vdwg.mxu0
      %v904 = vmax.f32 %v857, 0.0
      %v905 = vmax.f32 %v859, 0.0
      %v906 = vmax.f32 %v898, 0.0
      %v907 = vmax.f32 %v900, 0.0
      %v908 = vpack.c.bf16 %v904, %v904
      %v909 = vpack.c.bf16 %v905, %v905
      %v910 = vpack.c.bf16 %v906, %v906
      %v911 = vpack.c.bf16 %v907, %v907
      %v916 = vrot.slane %v908, 6
      %v917 = vrot.slane %v909, 6
      %v918 = vrot.slane %v910, 6
      %v919 = vrot.slane %v911, 6
      %920 = vrot.lane.b32.xlu0 %v916, 127
      %v921 = vpop.permute.xlu0 %920
      %922 = vrot.lane.b32.xlu0 %v917, 127
      %v923 = vpop.permute.xlu0 %922
      %924 = vrot.lane.b32.xlu0 %v918, 127
      %v925 = vpop.permute.xlu0 %924
      %926 = vrot.lane.b32.xlu0 %v919, 127
      %v927 = vpop.permute.xlu0 %926
      %v928 = vsel %vm323, %v921, %v923
      %v929 = vsel %vm323, %v923, %v925
      %v930 = vsel %vm323, %v925, %v927
      %v931 = vrot.slane %v908, 4
      %v932 = vrot.slane %v909, 4
      %v933 = vrot.slane %v910, 4
      %v934 = vrot.slane %v911, 4
      %935 = vrot.lane.b32.xlu0 %v931, 126
      %v936 = vpop.permute.xlu0 %935
      %937 = vrot.lane.b32.xlu0 %v932, 126
      %v938 = vpop.permute.xlu0 %937
      %939 = vrot.lane.b32.xlu0 %v933, 126
      %v940 = vpop.permute.xlu0 %939
      %941 = vrot.lane.b32.xlu0 %v934, 126
      %v942 = vpop.permute.xlu0 %941
      %v943 = vsel %vm337, %v936, %v938
      %v944 = vsel %vm337, %v938, %v940
      %v945 = vsel %vm337, %v940, %v942
      %v946 = vrot.slane %v908, 2
      %v947 = vrot.slane %v909, 2
      %v948 = vrot.slane %v910, 2
      %v949 = vrot.slane %v911, 2
      %950 = vrot.lane.b32.xlu0 %v946, 104
      %v951 = vpop.permute.xlu0 %950
      %952 = vrot.lane.b32.xlu0 %v947, 104
      %v953 = vpop.permute.xlu0 %952
      %954 = vrot.lane.b32.xlu0 %v948, 104
      %v955 = vpop.permute.xlu0 %954
      %956 = vrot.lane.b32.xlu0 %v949, 104
      %v957 = vpop.permute.xlu0 %956
      %v958 = vsel %vm374, %v951, %v953
      %v959 = vsel %vm374, %v953, %v955
      %v960 = vsel %vm374, %v955, %v957
      %961 = vrot.lane.b32.xlu0 %v908, 103
      %v962 = vpop.permute.xlu0 %961
      %963 = vrot.lane.b32.xlu0 %v909, 103
      %v964 = vpop.permute.xlu0 %963
      %965 = vrot.lane.b32.xlu0 %v910, 103
      %v966 = vpop.permute.xlu0 %965
      %967 = vrot.lane.b32.xlu0 %v911, 103
      %v968 = vpop.permute.xlu0 %967
      %v969 = vsel %vm386, %v962, %v964
      %v970 = vsel %vm386, %v964, %v966
      %v971 = vsel %vm386, %v966, %v968
      %972 = vrot.lane.b32.xlu0 %v916, 102
      %v973 = vpop.permute.xlu0 %972
      %974 = vrot.lane.b32.xlu0 %v917, 102
      %v975 = vpop.permute.xlu0 %974
      %976 = vrot.lane.b32.xlu0 %v918, 102
      %v977 = vpop.permute.xlu0 %976
      %978 = vrot.lane.b32.xlu0 %v919, 102
      %v979 = vpop.permute.xlu0 %978
      %v980 = vsel %vm398, %v973, %v975
      %v981 = vsel %vm398, %v975, %v977
      %v982 = vsel %vm398, %v977, %v979
      %983 = vrot.lane.b32.xlu0 %v931, 80
      %v984 = vpop.permute.xlu0 %983
      %985 = vrot.lane.b32.xlu0 %v932, 80
      %v986 = vpop.permute.xlu0 %985
      %987 = vrot.lane.b32.xlu0 %v933, 80
      %v988 = vpop.permute.xlu0 %987
      %989 = vrot.lane.b32.xlu0 %v934, 80
      %v990 = vpop.permute.xlu0 %989
      %v991 = vsel %vm445, %v984, %v986
      %v992 = vsel %vm445, %v986, %v988
      %v993 = vsel %vm445, %v988, %v990
      %994 = vrot.lane.b32.xlu0 %v946, 79
      %v995 = vpop.permute.xlu0 %994
      %996 = vrot.lane.b32.xlu0 %v947, 79
      %v997 = vpop.permute.xlu0 %996
      %998 = vrot.lane.b32.xlu0 %v948, 79
      %v999 = vpop.permute.xlu0 %998
      %1000 = vrot.lane.b32.xlu0 %v949, 79
      %v1001 = vpop.permute.xlu0 %1000
      %v1002 = vsel %vm469, %v995, %v997
      %v1003 = vsel %vm469, %v997, %v999
      %v1004 = vsel %vm469, %v999, %v1001
      %1005 = vrot.lane.b32.xlu0 %v908, 78
      %v1006 = vpop.permute.xlu0 %1005
      %1007 = vrot.lane.b32.xlu0 %v909, 78
      %v1008 = vpop.permute.xlu0 %1007
      %1009 = vrot.lane.b32.xlu0 %v910, 78
      %v1010 = vpop.permute.xlu0 %1009
      %1011 = vrot.lane.b32.xlu0 %v911, 78
      %v1012 = vpop.permute.xlu0 %1011
      %v1013 = vsel %vm484, %v1006, %v1008
      %v1014 = vsel %vm484, %v1008, %v1010
      %v1015 = vsel %vm484, %v1010, %v1012
      %v1018 = vsel %vm534, %v908, %v928
      %v1021 = vsel %vm534, %v909, %v929
      %v1024 = vsel %vm534, %v910, %v930
      %v1027 = vsel %vm534, %v911, %v927
      %v1029 = vsel %vm547, %v1018, %v943
      %v1031 = vsel %vm547, %v1021, %v944
      %v1033 = vsel %vm547, %v1024, %v945
      %v1035 = vsel %vm547, %v1027, %v942
      %v1037 = vsel %vm556, %v1029, %v958
      %v1040 = vsel %vm556, %v1031, %v959
      %v1043 = vsel %vm556, %v1033, %v960
      %v1046 = vsel %vm556, %v1035, %v957
      %v1050 = vsel %vm534, %v969, %v980
      %v1053 = vsel %vm534, %v970, %v981
      %v1056 = vsel %vm534, %v971, %v982
      %v1059 = vsel %vm534, %v968, %v979
      %v1061 = vsel %vm547, %v1050, %v991
      %v1063 = vsel %vm547, %v1053, %v992
      %v1065 = vsel %vm547, %v1056, %v993
      %v1067 = vsel %vm547, %v1059, %v990
      %v1069 = vsel %vm556, %v1061, %v1002
      %v1072 = vsel %vm556, %v1063, %v1003
      %v1075 = vsel %vm556, %v1065, %v1004
      %v1078 = vsel %vm556, %v1067, %v1001
      %1081 = vset.pattern.permute.xlu0 0
      %1082 = vperm.xlu0 %1081, %v283
      %v1083 = vpop.permute.xlu0 %1082
      %vm1085 = vcmask 293888
      %v1087 = vsel %vm1085, %v282, 0
      %v1090 = vsel %vm534, %v1013, 0
      %v1093 = vsel %vm534, %v1014, 0
      %v1096 = vsel %vm534, %v1015, 0
      %v1099 = vsel %vm534, %v1012, 0
      %1101 = vmatprep.subr.bf16.mxu0 0
      %1102 = vmatpush1.bf16.msra.mxu0 0
      %1103 = vmatprep.subr.bf16.mxu0 0
      %1104 = vmatpush1.bf16.msra.mxu0 0
      %1105 = vmatprep.subr.bf16.mxu0 0
      %1106 = vmatpush1.bf16.msra.mxu0 0
      %1107 = vmatprep.subr.bf16.mxu0 0
      %1108 = vmatpush1.bf16.msra.mxu0 0
      %1109 = vmatprep.subr.bf16.mxu0 0
      %1110 = vmatpush1.bf16.msra.mxu0 0
      %1111 = vmatprep.subr.bf16.mxu0 %v1093
      %1112 = vmatpush1.bf16.msra.mxu0 %v1090
      %1113 = vmatprep.subr.bf16.mxu0 %v1072
      %1114 = vmatpush1.bf16.msra.mxu0 %v1069
      %1115 = vmatprep.subr.bf16.mxu0 %v1040
      %1116 = vmatpush1.bf16.msra.mxu0 %v1037
      %1117 = vmatprep.subr.bf16.mxu0 0
      %1118 = vmatpush2.bf16.msra.mxu0 0
      %1119 = vmatprep.subr.bf16.mxu0 0
      %1120 = vmatpush2.bf16.msra.mxu0 0
      %1121 = vmatprep.subr.bf16.mxu0 0
      %1122 = vmatpush2.bf16.msra.mxu0 0
      %1123 = vmatprep.subr.bf16.mxu0 0
      %1124 = vmatpush2.bf16.msra.mxu0 0
      %1125 = vmatprep.subr.bf16.mxu0 0
      %1126 = vmatpush2.bf16.msra.mxu0 0
      %1127 = vmatprep.subr.bf16.mxu0 0
      %1128 = vmatpush2.bf16.msra.mxu0 0
      %1129 = vmatprep.subr.bf16.mxu0 0
      %1130 = vmatpush2.bf16.msra.mxu0 0
      %1131 = vmatprep.subr.bf16.mxu0 0
      %1132 = vmatpush2.bf16.msra.mxu0 0
      %1133 = vmatprep.mubr.bf16.mxu0 0
      %1134 = vmatmul.mubr.bf16.gmra.mxu0 %v1087
      %v1135 = vpop.f32.mrf.mxu0
      %v1136 = vadd.f32 %v1083, %v1135
      %v1137 = vpop.f32.mrf.mxu0
      %v1138 = vadd.f32 %v1083, %v1137
      %v1139 = vpop.f32.mrf.mxu0
      %v1140 = vpop.f32.mrf.mxu0
      %1141 = vdwg.mxu0
      %1142 = vmatprep.subr.bf16.mxu0 0
      %1143 = vmatpush1.bf16.msra.mxu0 0
      %1144 = vmatprep.subr.bf16.mxu0 0
      %1145 = vmatpush1.bf16.msra.mxu0 0
      %1146 = vmatprep.subr.bf16.mxu0 0
      %1147 = vmatpush1.bf16.msra.mxu0 0
      %1148 = vmatprep.subr.bf16.mxu0 0
      %1149 = vmatpush1.bf16.msra.mxu0 0
      %1150 = vmatprep.subr.bf16.mxu0 0
      %1151 = vmatpush1.bf16.msra.mxu0 0
      %1152 = vmatprep.subr.bf16.mxu0 %v1099
      %1153 = vmatpush1.bf16.msra.mxu0 %v1096
      %1154 = vmatprep.subr.bf16.mxu0 %v1078
      %1155 = vmatpush1.bf16.msra.mxu0 %v1075
      %1156 = vmatprep.subr.bf16.mxu0 %v1046
      %1157 = vmatpush1.bf16.msra.mxu0 %v1043
      %1158 = vmatprep.subr.bf16.mxu0 0
      %1159 = vmatpush2.bf16.msra.mxu0 0
      %1160 = vmatprep.subr.bf16.mxu0 0
      %1161 = vmatpush2.bf16.msra.mxu0 0
      %1162 = vmatprep.subr.bf16.mxu0 0
      %1163 = vmatpush2.bf16.msra.mxu0 0
      %1164 = vmatprep.subr.bf16.mxu0 0
      %1165 = vmatpush2.bf16.msra.mxu0 0
      %1166 = vmatprep.subr.bf16.mxu0 0
      %1167 = vmatpush2.bf16.msra.mxu0 0
      %1168 = vmatprep.subr.bf16.mxu0 0
      %1169 = vmatpush2.bf16.msra.mxu0 0
      %1170 = vmatprep.subr.bf16.mxu0 0
      %1171 = vmatpush2.bf16.msra.mxu0 0
      %1172 = vmatprep.subr.bf16.mxu0 0
      %1173 = vmatpush2.bf16.msra.mxu0 0
      %1174 = vmatprep.mubr.bf16.mxu0 0
      %1175 = vmatmul.mubr.bf16.gmra.mxu0 %v1087
      %v1176 = vpop.f32.mrf.mxu0
      %v1177 = vadd.f32 %v1083, %v1176
      %v1178 = vpop.f32.mrf.mxu0
      %v1179 = vadd.f32 %v1083, %v1178
      %v1180 = vpop.f32.mrf.mxu0
      %v1181 = vpop.f32.mrf.mxu0
      %1182 = vdwg.mxu0
      %v1183 = vmax.f32 %v1136, 0.0
      %v1184 = vmax.f32 %v1138, 0.0
      %v1185 = vmax.f32 %v1177, 0.0
      %v1186 = vmax.f32 %v1179, 0.0
      %1191 = vrot.lane.b32.xlu0 %v1183, 127
      %v1192 = vpop.permute.xlu0 %1191
      %1193 = vrot.lane.b32.xlu0 %v1184, 127
      %v1194 = vpop.permute.xlu0 %1193
      %1195 = vrot.lane.b32.xlu0 %v1185, 127
      %v1196 = vpop.permute.xlu0 %1195
      %1197 = vrot.lane.b32.xlu0 %v1186, 127
      %v1198 = vpop.permute.xlu0 %1197
      %vm1199 = vcmask 1039360
      %v1200 = vsel %vm1199, %v1192, %v1194
      %v1201 = vsel %vm1199, %v1194, %v1196
      %v1202 = vsel %vm1199, %v1196, %v1198
      %1206 = vrot.lane.b32.xlu0 %v1183, 126
      %v1207 = vpop.permute.xlu0 %1206
      %1208 = vrot.lane.b32.xlu0 %v1184, 126
      %v1209 = vpop.permute.xlu0 %1208
      %1210 = vrot.lane.b32.xlu0 %v1185, 126
      %v1211 = vpop.permute.xlu0 %1210
      %1212 = vrot.lane.b32.xlu0 %v1186, 126
      %v1213 = vpop.permute.xlu0 %1212
      %vm1214 = vcmask 1031168
      %v1215 = vsel %vm1214, %v1207, %v1209
      %v1216 = vsel %vm1214, %v1209, %v1211
      %v1217 = vsel %vm1214, %v1211, %v1213
      %1221 = vrot.lane.b32.xlu0 %v1183, 104
      %v1222 = vpop.permute.xlu0 %1221
      %1223 = vrot.lane.b32.xlu0 %v1184, 104
      %v1224 = vpop.permute.xlu0 %1223
      %1225 = vrot.lane.b32.xlu0 %v1185, 104
      %v1226 = vpop.permute.xlu0 %1225
      %1227 = vrot.lane.b32.xlu0 %v1186, 104
      %v1228 = vpop.permute.xlu0 %1227
      %vm1229 = vcmask 850944
      %v1230 = vsel %vm1229, %v1222, %v1224
      %v1231 = vsel %vm1229, %v1224, %v1226
      %v1232 = vsel %vm1229, %v1226, %v1228
      %1236 = vrot.lane.b32.xlu0 %v1183, 103
      %v1237 = vpop.permute.xlu0 %1236
      %1238 = vrot.lane.b32.xlu0 %v1184, 103
      %v1239 = vpop.permute.xlu0 %1238
      %1240 = vrot.lane.b32.xlu0 %v1185, 103
      %v1241 = vpop.permute.xlu0 %1240
      %1242 = vrot.lane.b32.xlu0 %v1186, 103
      %v1243 = vpop.permute.xlu0 %1242
      %vm1244 = vcmask 842752
      %v1245 = vsel %vm1244, %v1237, %v1239
      %v1246 = vsel %vm1244, %v1239, %v1241
      %v1247 = vsel %vm1244, %v1241, %v1243
      %1251 = vrot.lane.b32.xlu0 %v1183, 102
      %v1252 = vpop.permute.xlu0 %1251
      %1253 = vrot.lane.b32.xlu0 %v1184, 102
      %v1254 = vpop.permute.xlu0 %1253
      %1255 = vrot.lane.b32.xlu0 %v1185, 102
      %v1256 = vpop.permute.xlu0 %1255
      %1257 = vrot.lane.b32.xlu0 %v1186, 102
      %v1258 = vpop.permute.xlu0 %1257
      %vm1259 = vcmask 834560
      %v1260 = vsel %vm1259, %v1252, %v1254
      %v1261 = vsel %vm1259, %v1254, %v1256
      %v1262 = vsel %vm1259, %v1256, %v1258
      %1266 = vrot.lane.b32.xlu0 %v1183, 80
      %v1267 = vpop.permute.xlu0 %1266
      %1268 = vrot.lane.b32.xlu0 %v1184, 80
      %v1269 = vpop.permute.xlu0 %1268
      %1270 = vrot.lane.b32.xlu0 %v1185, 80
      %v1271 = vpop.permute.xlu0 %1270
      %1272 = vrot.lane.b32.xlu0 %v1186, 80
      %v1273 = vpop.permute.xlu0 %1272
      %vm1274 = vcmask 654336
      %v1275 = vsel %vm1274, %v1267, %v1269
      %v1276 = vsel %vm1274, %v1269, %v1271
      %v1277 = vsel %vm1274, %v1271, %v1273
      %1281 = vrot.lane.b32.xlu0 %v1183, 79
      %v1282 = vpop.permute.xlu0 %1281
      %1283 = vrot.lane.b32.xlu0 %v1184, 79
      %v1284 = vpop.permute.xlu0 %1283
      %1285 = vrot.lane.b32.xlu0 %v1185, 79
      %v1286 = vpop.permute.xlu0 %1285
      %1287 = vrot.lane.b32.xlu0 %v1186, 79
      %v1288 = vpop.permute.xlu0 %1287
      %vm1289 = vcmask 646144
      %v1290 = vsel %vm1289, %v1282, %v1284
      %v1291 = vsel %vm1289, %v1284, %v1286
      %v1292 = vsel %vm1289, %v1286, %v1288
      %1296 = vrot.lane.b32.xlu0 %v1183, 78
      %v1297 = vpop.permute.xlu0 %1296
      %1298 = vrot.lane.b32.xlu0 %v1184, 78
      %v1299 = vpop.permute.xlu0 %1298
      %1300 = vrot.lane.b32.xlu0 %v1185, 78
      %v1301 = vpop.permute.xlu0 %1300
      %1302 = vrot.lane.b32.xlu0 %v1186, 78
      %v1303 = vpop.permute.xlu0 %1302
      %vm1304 = vcmask 637952
      %v1305 = vsel %vm1304, %v1297, %v1299
      %v1306 = vsel %vm1304, %v1299, %v1301
      %v1307 = vsel %vm1304, %v1301, %v1303
      %1312 = vset.pattern.permute.xlu0 0
      %1313 = vperm.xlu0 %1312, %v285
      %v1314 = vpop.permute.xlu0 %1313
      %v1316 = vlaneseq
      %v1317 = vshrl.u32 %v1316, 7
      %v1318 = vsub.s32 0, %v1317
      %v1319 = vrot.slane %v1314, %v1318
      %vm1320 = vcmask 588800
      %v1322 = vsel %vm1320, %v284, 0
      %1324 = vmatprep.subr.mxu0 0.0
      %1325 = vmatpush1.msra.mxu0 0.0
      %1326 = vmatprep.subr.mxu0 0.0
      %1327 = vmatpush1.msra.mxu0 0.0
      %1328 = vmatprep.subr.mxu0 0.0
      %1329 = vmatpush1.msra.mxu0 0.0
      %1330 = vmatprep.subr.mxu0 0.0
      %1331 = vmatpush1.msra.mxu0 0.0
      %1332 = vmatprep.subr.mxu0 0.0
      %1333 = vmatpush1.msra.mxu0 0.0
      %1334 = vmatprep.subr.mxu0 0.0
      %1335 = vmatpush1.msra.mxu0 0.0
      %1336 = vmatprep.subr.mxu0 0.0
      %1337 = vmatpush1.msra.mxu0 0.0
      %1338 = vmatprep.subr.mxu0 %v1306
      %1339 = vmatpush1.msra.mxu0 %v1305
      %1340 = vmatprep.subr.mxu0 %v1291
      %1341 = vmatpush1.msra.mxu0 %v1290
      %1342 = vmatprep.subr.mxu0 %v1276
      %1343 = vmatpush1.msra.mxu0 %v1275
      %1344 = vmatprep.subr.mxu0 %v1261
      %1345 = vmatpush1.msra.mxu0 %v1260
      %1346 = vmatprep.subr.mxu0 %v1246
      %1347 = vmatpush1.msra.mxu0 %v1245
      %1348 = vmatprep.subr.mxu0 %v1231
      %1349 = vmatpush1.msra.mxu0 %v1230
      %1350 = vmatprep.subr.mxu0 %v1216
      %1351 = vmatpush1.msra.mxu0 %v1215
      %1352 = vmatprep.subr.mxu0 %v1201
      %1353 = vmatpush1.msra.mxu0 %v1200
      %1354 = vmatprep.subr.mxu0 %v1184
      %1355 = vmatpush1.msra.mxu0 %v1183
      %1356 = vmatprep.subr.mxu0 0.0
      %1357 = vmatpush2.msra.mxu0 0.0
      %1358 = vmatprep.subr.mxu0 0.0
      %1359 = vmatpush2.msra.mxu0 0.0
      %1360 = vmatprep.subr.mxu0 0.0
      %1361 = vmatpush2.msra.mxu0 0.0
      %1362 = vmatprep.subr.mxu0 0.0
      %1363 = vmatpush2.msra.mxu0 0.0
      %1364 = vmatprep.subr.mxu0 0.0
      %1365 = vmatpush2.msra.mxu0 0.0
      %1366 = vmatprep.subr.mxu0 0.0
      %1367 = vmatpush2.msra.mxu0 0.0
      %1368 = vmatprep.subr.mxu0 0.0
      %1369 = vmatpush2.msra.mxu0 0.0
      %1370 = vmatprep.subr.mxu0 0.0
      %1371 = vmatpush2.msra.mxu0 0.0
      %1372 = vmatprep.subr.mxu0 0.0
      %1373 = vmatpush2.msra.mxu0 0.0
      %1374 = vmatprep.subr.mxu0 0.0
      %1375 = vmatpush2.msra.mxu0 0.0
      %1376 = vmatprep.subr.mxu0 0.0
      %1377 = vmatpush2.msra.mxu0 0.0
      %1378 = vmatprep.subr.mxu0 0.0
      %1379 = vmatpush2.msra.mxu0 0.0
      %1380 = vmatprep.subr.mxu0 0.0
      %1381 = vmatpush2.msra.mxu0 0.0
      %1382 = vmatprep.subr.mxu0 0.0
      %1383 = vmatpush2.msra.mxu0 0.0
      %1384 = vmatprep.subr.mxu0 0.0
      %1385 = vmatpush2.msra.mxu0 0.0
      %1386 = vmatprep.subr.mxu0 0.0
      %1387 = vmatpush2.msra.mxu0 0.0
      %1388 = vmatprep.mubr.f32.mxu0 0.0
      %1389 = vmatmul.mubr.f32.gmra.mxu0 %v1322
      %v1390 = vpop.f32.mrf.mxu0
      %v1391 = vadd.f32 %v1319, %v1390
      %v1392 = vpop.f32.mrf.mxu0
      %v1393 = vadd.f32 %v1319, %v1392
      %1394 = vdwg.mxu0
      %1395 = vmatprep.subr.mxu0 0.0
      %1396 = vmatpush1.msra.mxu0 0.0
      %1397 = vmatprep.subr.mxu0 0.0
      %1398 = vmatpush1.msra.mxu0 0.0
      %1399 = vmatprep.subr.mxu0 0.0
      %1400 = vmatpush1.msra.mxu0 0.0
      %1401 = vmatprep.subr.mxu0 0.0
      %1402 = vmatpush1.msra.mxu0 0.0
      %1403 = vmatprep.subr.mxu0 0.0
      %1404 = vmatpush1.msra.mxu0 0.0
      %1405 = vmatprep.subr.mxu0 0.0
      %1406 = vmatpush1.msra.mxu0 0.0
      %1407 = vmatprep.subr.mxu0 0.0
      %1408 = vmatpush1.msra.mxu0 0.0
      %1409 = vmatprep.subr.mxu0 0.0
      %1410 = vmatpush1.msra.mxu0 %v1307
      %1411 = vmatprep.subr.mxu0 0.0
      %1412 = vmatpush1.msra.mxu0 %v1292
      %1413 = vmatprep.subr.mxu0 0.0
      %1414 = vmatpush1.msra.mxu0 %v1277
      %1415 = vmatprep.subr.mxu0 0.0
      %1416 = vmatpush1.msra.mxu0 %v1262
      %1417 = vmatprep.subr.mxu0 0.0
      %1418 = vmatpush1.msra.mxu0 %v1247
      %1419 = vmatprep.subr.mxu0 0.0
      %1420 = vmatpush1.msra.mxu0 %v1232
      %1421 = vmatprep.subr.mxu0 0.0
      %1422 = vmatpush1.msra.mxu0 %v1217
      %1423 = vmatprep.subr.mxu0 0.0
      %1424 = vmatpush1.msra.mxu0 %v1202
      %1425 = vmatprep.subr.mxu0 0.0
      %1426 = vmatpush1.msra.mxu0 %v1185
      %1427 = vmatprep.subr.mxu0 0.0
      %1428 = vmatpush2.msra.mxu0 0.0
      %1429 = vmatprep.subr.mxu0 0.0
      %1430 = vmatpush2.msra.mxu0 0.0
      %1431 = vmatprep.subr.mxu0 0.0
      %1432 = vmatpush2.msra.mxu0 0.0
      %1433 = vmatprep.subr.mxu0 0.0
      %1434 = vmatpush2.msra.mxu0 0.0
      %1435 = vmatprep.subr.mxu0 0.0
      %1436 = vmatpush2.msra.mxu0 0.0
      %1437 = vmatprep.subr.mxu0 0.0
      %1438 = vmatpush2.msra.mxu0 0.0
      %1439 = vmatprep.subr.mxu0 0.0
      %1440 = vmatpush2.msra.mxu0 0.0
      %1441 = vmatprep.subr.mxu0 0.0
      %1442 = vmatpush2.msra.mxu0 0.0
      %1443 = vmatprep.subr.mxu0 0.0
      %1444 = vmatpush2.msra.mxu0 0.0
      %1445 = vmatprep.subr.mxu0 0.0
      %1446 = vmatpush2.msra.mxu0 0.0
      %1447 = vmatprep.subr.mxu0 0.0
      %1448 = vmatpush2.msra.mxu0 0.0
      %1449 = vmatprep.subr.mxu0 0.0
      %1450 = vmatpush2.msra.mxu0 0.0
      %1451 = vmatprep.subr.mxu0 0.0
      %1452 = vmatpush2.msra.mxu0 0.0
      %1453 = vmatprep.subr.mxu0 0.0
      %1454 = vmatpush2.msra.mxu0 0.0
      %1455 = vmatprep.subr.mxu0 0.0
      %1456 = vmatpush2.msra.mxu0 0.0
      %1457 = vmatprep.subr.mxu0 0.0
      %1458 = vmatpush2.msra.mxu0 0.0
      %1459 = vmatprep.mubr.f32.mxu0 0.0
      %1460 = vmatmul.mubr.f32.gmra.mxu0 %v1322
      %v1461 = vpop.f32.mrf.mxu0
      %v1462 = vadd.f32 %v1319, %v1461
      %v1463 = vpop.f32.mrf.mxu0
      %1464 = vdwg.mxu0
      %v1468 = vcombine.low %v1391, %v1393
      %v1470 = vunpack.c.l.s4 1966171168
      %v1471 = vunpack.c.0.s8 %v1470
      %v1472 = vlaneseq
      %v1473 = vshrl.u32 %v1472, 7
      %v1474 = vsub.s32 %v1471, %v1473
      %v1475 = vrot.slane %v1468, %v1474
      %v1477 = vunpack.c.l.s4 1966171168
      %v1478 = vunpack.c.0.s8 %v1477
      %v1479 = vlaneseq
      %v1480 = vshrl.u32 %v1479, 7
      %v1481 = vsub.s32 %v1478, %v1480
      %v1482 = vrot.slane %v1462, %v1481
      %v1483 = vcombine.low %v1475, %v1482
      %v1485 = vunpack.c.l.s4 1966171168
      %v1486 = vunpack.c.0.s8 %v1485
      %v1487 = vlaneseq
      %v1488 = vshrl.u32 %v1487, 7
      %v1489 = vsub.s32 %v1486, %v1488
      %v1490 = vrot.slane %v1483, %v1489
      %v1492 = vlaneseq
      %vm1493 = vcmp.ge.s32.totalorder %v1492, 0
      %vm1494 = vcmp.lt.s32.totalorder %v1492, 384
      %vm1495 = vmand %vm1493, %vm1494
      %1496 = vst.msk [vmem:[%s278] sm:$0x7] %vm1495, %v1490
      %p1497 = scmp.lt.s32.totalorder %s20, 1
      %s1498 = scalar_select %p1497, %s20, 1
      %s1499 = smul.addr %s1498, 3
      %s1500 = scalar_lea.vmem %s7, %s1499
      // Predicated region
      $region49: #{fcn_forward.1} parent=47 // pred_check
        %p1501 = pneg %p190
      $region50: #{fcn_forward.1} parent=47 // pred_check_branch
        %1503 = sbr.rel (%p1501) target = $region52
      $region51: #{fcn_forward.1} parent=47 // pred_region
        _
      $region52: #{fcn_forward.1} parent=47 // pred_fallthru
        _
    $region48: #{fcn_forward.1} parent=5 // pred_fallthru
      _
    %p1504 = scmp.le.s32.totalorder 2, %s15
    // Predicated region
    $region53: #{fcn_forward.1} parent=5 // pred_check
      %p1505 = pneg %p1504
    $region54: #{fcn_forward.1} parent=5 // pred_check_branch
      %1507 = sbr.rel (%p1505) target = $region56
    $region55: #{fcn_forward.1} parent=5 // pred_region
      %s1508 = ssub.s32 %s15, 2
      // Predicated region
      $region57: #{fcn_forward.1} parent=55 // pred_check
        %p1509 = pneg %p196
      $region58: #{fcn_forward.1} parent=55 // pred_check_branch
        %1511 = sbr.rel (%p1509) target = $region60
      $region59: #{fcn_forward.1} parent=55 // pred_region
        %p1512 = scmp.lt.s32.totalorder %s21, 1
        %s1513 = scalar_select %p1512, %s21, 1
        %s1514 = smul.addr %s1513, 3
        %s1515 = scalar_lea.vmem %s7, %s1514
      $region60: #{fcn_forward.1} parent=55 // pred_fallthru
        _
    $region56: #{fcn_forward.1} parent=5 // pred_fallthru
      _
  $region6: #{fcn_forward.1} parent=0 // loop_footer
    %s19 = sadd.s32 1, %s15
  $region7: #{fcn_forward.1} parent=0 // loop_footer_branch
    %14 = sbr.rel target = $region3
  $region8: #{fcn_forward.1} parent=0 // loop_exit
    _

</llo_original>
